<compile_context>
chip_gen: v7x
topology: tpu7x:2x2x1
jax: 0.10.0
libtpu: 0.0.40
codegen_flags: <defaults>
</compile_context>

<pallas_src>
import functools
import math

import jax
import jax.numpy as jnp
from jax.experimental import pallas as pl
from jax.experimental.pallas import tpu as pltpu

_LANE = 128
_HIGHEST = jax.lax.Precision.HIGHEST


def _round_up(n, m):
    return (n + m - 1) // m * m


def _pick_band_rows(h_out, w_out, target_rows=1024):
    """Largest row-band height R dividing h_out with R*w_out a multiple of 8
    (unmasked lane-dense stores) and a bounded per-step working set."""
    if h_out * w_out <= target_rows:
        return h_out
    best = h_out
    for r in range(1, h_out):
        if h_out % r == 0 and (r * w_out) % 8 == 0 and r * w_out <= target_rows:
            best = r
    return best


# ---------------------------------------------------------------------------
# Fused per-(sample, row-band) kernel:
#   modulated conv (tap-wise MXU accumulation) + demod + noise + bias + lReLU
# ---------------------------------------------------------------------------
def _fused_stage_kernel(s_ref, d_ref, w_ref, x_ref, noise_ref, bias_ref, o_ref, *,
                        band_rows, w_out, kh, kw, c_in_p, c_out, c_out_p,
                        neg_slope, act_gain, compute_dtype):
    nrows = band_rows + kh - 1                       # band + halo rows (padded coords)
    row0 = pl.multiple_of(pl.program_id(1) * band_rows, band_rows)
    m_band = band_rows * w_out

    # 1) modulate the band (+halo) with the per-sample style (forward-equivalent
    #    to modulating the weight).  x is already zero-padded & compute-dtype,
    #    so there is no in-kernel zero fill.
    s = s_ref[...].reshape(1, 1, c_in_p).astype(compute_dtype)
    xband = x_ref[pl.ds(row0, nrows), :, :] * s      # (nrows, w_pad, Ci_p)

    # 2) tap-wise accumulation (no im2col buffer).  The kx sublane shift is
    #    hoisted out of the ky loop (kw shifted copies instead of kh*kw); every
    #    ky tap is then a free leading-dim slice.  kh*kw small MXU dots, f32 acc.
    acc = jnp.zeros((m_band, c_out_p), jnp.float32)
    for kx in range(kw):
        xs = xband[:, kx:kx + w_out, :].reshape(nrows * w_out, c_in_p)
        for ky in range(kh):
            lhs = xs[ky * w_out:ky * w_out + m_band, :]
            acc = acc + jnp.dot(lhs, w_ref[ky * kw + kx],
                                preferred_element_type=jnp.float32)

    # 3) epilogue (VPU): demodulate, add pre-scaled noise, bias, leaky-ReLU*gain.
    y = acc * d_ref[...]                             # (M,Co)*(1,Co)
    y = y + noise_ref[...]                           # (M,1) broadcast
    y = y + bias_ref[...]                            # (1,Co)
    y = jnp.where(y >= 0.0, y, neg_slope * y) * act_gain
    if c_out != c_out_p:                             # padded channels exactly zero
        ch = jax.lax.broadcasted_iota(jnp.int32, (1, c_out_p), 1)
        y = jnp.where(ch < c_out, y, 0.0)
    o_ref[...] = y.astype(o_ref.dtype)


# ---------------------------------------------------------------------------
# One stage wrapper: Conv2dModulated -> AddNoise(per_channel=False) -> FusedLeakyReLU
# ---------------------------------------------------------------------------
def modulated_conv_block_nhwc(x, w_latent, conv_weight, affine_w, affine_b,
                              noise, noise_strength, act_bias, *,
                              padding=(1, 1), demodulate=True,
                              negative_slope=0.2, act_gain=math.sqrt(2.0),
                              compute_dtype=jnp.bfloat16,
                              band_rows=None,
                              keep_padded_output=False,
                              out_dtype=None):
    """x: (bs,H,W,Cin) or channel-padded (bs,H,W,round_up(Cin,128)) NHWC.
    conv_weight: (Cout,Cin,kh,kw) OIHW.  noise: (bs,Hout,Wout) single-channel."""
    out_dtype = x.dtype if out_dtype is None else out_dtype
    bs, h_in, w_in, x_c = x.shape
    c_out, c_in, kh, kw = conv_weight.shape
    ph, pw = padding
    h_out = h_in + 2 * ph - kh + 1                   # stride-1, no upsample
    w_out = w_in + 2 * pw - kw + 1
    m = h_out * w_out
    c_in_p = _round_up(c_in, _LANE)
    c_out_p = _round_up(c_out, _LANE)
    assert x_c in (c_in, c_in_p), (x_c, c_in, c_in_p)
    assert noise.shape == (bs, h_out, w_out), noise.shape

    if band_rows is None:
        band_rows = _pick_band_rows(h_out, w_out)
    assert h_out % band_rows == 0, (h_out, band_rows)
    assert band_rows == h_out or (band_rows * w_out) % 8 == 0, (band_rows, w_out)
    n_bands = h_out // band_rows
    m_band = band_rows * w_out

    f32 = jnp.float32
    # ---- per-sample style path (tiny glue, like the PyTorch affine) --------
    s = jnp.matmul(w_latent.astype(f32), affine_w.astype(f32).T,
                   precision=_HIGHEST) + affine_b.astype(f32) + 1.0      # (bs,Ci)
    if demodulate:
        # d[b,o] = rsqrt(sum_{i,k}(w[o,i,k]*s[b,i])^2 + 1e-8)
        w_sq = jnp.sum(conv_weight.astype(f32) ** 2, axis=(2, 3))        # (Co,Ci)
        d = jax.lax.rsqrt(jnp.matmul(s * s, w_sq.T, precision=_HIGHEST) + 1e-8)
    else:
        d = jnp.ones((bs, c_out), f32)
    s_p = jnp.pad(s, ((0, 0), (0, c_in_p - c_in)))[:, None, :]           # (bs,1,Cip)
    d_p = jnp.pad(d, ((0, 0), (0, c_out_p - c_out)))[:, None, :]         # (bs,1,Cop)

    # ---- shared weight: OIHW -> per-tap (kh*kw, Cip, Cop), cast once -------
    w_hwio = jnp.transpose(conv_weight, (2, 3, 1, 0)).astype(f32)
    w_hwio = jnp.pad(w_hwio, ((0, 0), (0, 0),
                              (0, c_in_p - c_in), (0, c_out_p - c_out)))
    w_taps = w_hwio.reshape(kh * kw, c_in_p, c_out_p).astype(compute_dtype)

    # ---- activations: lane-dense channel pad + spatial zero pad + cast -----
    # (one wrapper copy: the spatial pad rides on the channel pad/cast that was
    #  already needed, so there is no in-kernel zero-fill and band halos are
    #  always in-bounds)
    x_p = jnp.pad(x, ((0, 0), (ph, ph), (pw, pw), (0, c_in_p - x_c)))
    x_p = x_p.astype(compute_dtype)
    h_pad, w_pad = h_in + 2 * ph, w_in + 2 * pw

    # ---- noise / bias --------------------------------------------------------
    nstr = jnp.asarray(noise_strength, f32)
    noise_flat = (noise.astype(f32) * nstr).reshape(bs, m, 1)
    bias_p = jnp.pad(act_bias.astype(f32), (0, c_out_p - c_out))[None, :]

    kernel = functools.partial(
        _fused_stage_kernel, band_rows=band_rows, w_out=w_out, kh=kh, kw=kw,
        c_in_p=c_in_p, c_out=c_out, c_out_p=c_out_p,
        neg_slope=negative_slope, act_gain=act_gain, compute_dtype=compute_dtype)

    out_flat = pl.pallas_call(
        kernel,
        out_shape=jax.ShapeDtypeStruct((bs, m, c_out_p), out_dtype),
        grid_spec=pltpu.PrefetchScalarGridSpec(
            num_scalar_prefetch=0,
            grid=(bs, n_bands),
            in_specs=[
                pl.BlockSpec((None, 1, c_in_p), lambda b, r: (b, 0, 0)),   # style s[b]
                pl.BlockSpec((None, 1, c_out_p), lambda b, r: (b, 0, 0)),  # demod d[b]
                pl.BlockSpec((kh * kw, c_in_p, c_out_p),
                             lambda b, r: (0, 0, 0)),                      # weight (resident)
                pl.BlockSpec((None, h_pad, w_pad, c_in_p),
                             lambda b, r: (b, 0, 0, 0)),                   # x[b] (revisit: 1 DMA/sample)
                pl.BlockSpec((None, m_band, 1), lambda b, r: (b, r, 0)),   # scaled noise band
                pl.BlockSpec((1, c_out_p), lambda b, r: (0, 0)),           # act bias (resident)
            ],
            out_specs=pl.BlockSpec((None, m_band, c_out_p),
                                   lambda b, r: (b, r, 0)),
            scratch_shapes=[]),
        compiler_params=pltpu.CompilerParams(
            dimension_semantics=("parallel", "parallel"),
            vmem_limit_bytes=32 * 1024 * 1024),
    )(s_p, d_p, w_taps, x_p, noise_flat, bias_p)

    out = out_flat.reshape(bs, h_out, w_out, c_out_p)
    if not keep_padded_output:
        out = out[..., :c_out]
    return out


# ---------------------------------------------------------------------------
# Full StyleGeneratorBlock forward (NHWC).  A PyTorch drop-in would transpose
# NCHW<->NHWC once at the network boundary only.
# ---------------------------------------------------------------------------
def style_generator_block_nhwc(
        x, w1, w2=None, noise1=None, noise2=None, *,
        conv2_weight, affine2_w, affine2_b, noise2_strength, bias2,
        use_first_conv=False,
        conv1_weight=None, affine1_w=None, affine1_b=None,
        noise1_strength=None, bias1=None,
        compute_dtype=jnp.bfloat16, band_rows=None):
    y = x
    if use_first_conv:
        # intermediate stays channel-padded and in compute precision (no slice,
        # no widening copy between the two stages)
        y = modulated_conv_block_nhwc(
            y, w1, conv1_weight, affine1_w, affine1_b,
            noise1, noise1_strength, bias1,
            compute_dtype=compute_dtype, band_rows=band_rows,
            keep_padded_output=True, out_dtype=compute_dtype)
    w2_eff = w1 if (w2 is None or not use_first_conv) else w2
    n2_eff = noise1 if not use_first_conv else noise2
    y = modulated_conv_block_nhwc(
        y, w2_eff, conv2_weight, affine2_w, affine2_b,
        n2_eff, noise2_strength, bias2,
        compute_dtype=compute_dtype, band_rows=band_rows)
    return y


# ---------------------------------------------------------------------------
# Pure-JAX reference mirroring the PyTorch module (NCHW, fused_modconv path)
# ---------------------------------------------------------------------------
def _ref_modulated_conv(x_nchw, w_latent, weight, affine_w, affine_b,
                        demodulate=True, padding=1):
    s = jnp.matmul(w_latent, affine_w.T, precision=_HIGHEST) + affine_b + 1.0
    wm = s[:, None, :, None, None] * weight[None]               # (bs,Co,Ci,kh,kw)
    if demodulate:
        dc = jax.lax.rsqrt(jnp.sum(wm ** 2, axis=(2, 3, 4)) + 1e-8)
        wm = dc[:, :, None, None, None] * wm
    outs = []
    for b in range(x_nchw.shape[0]):
        outs.append(jax.lax.conv_general_dilated(
            x_nchw[b:b + 1], wm[b], window_strides=(1, 1),
            padding=[(padding, padding), (padding, padding)],
            dimension_numbers=("NCHW", "OIHW", "NCHW"),
            precision=_HIGHEST))
    return jnp.concatenate(outs, axis=0)


def _ref_stage(x_nchw, w_latent, weight, affine_w, affine_b,
               noise_hw, noise_strength, bias,
               negative_slope=0.2, act_gain=math.sqrt(2.0)):
    y = _ref_modulated_conv(x_nchw, w_latent, weight, affine_w, affine_b)
    y = y + noise_strength * noise_hw[:, None, :, :]            # AddNoise (scalar weight)
    y = y + bias[None, :, None, None]                           # FusedLeakyReLU bias
    return jnp.where(y >= 0, y, negative_slope * y) * act_gain


def _ref_style_generator_block(x_nchw, w1, w2, noise1, noise2, p, use_first_conv):
    y = x_nchw
    if use_first_conv:
        y = _ref_stage(y, w1, p["conv1_w"], p["aff1_w"], p["aff1_b"],
                       noise1, p["nstr1"], p["bias1"])
    w2_eff = w1 if (w2 is None or not use_first_conv) else w2
    n2_eff = noise1 if not use_first_conv else noise2
    return _ref_stage(y, w2_eff, p["conv2_w"], p["aff2_w"], p["aff2_b"],
                      n2_eff, p["nstr2"], p["bias2"])


if __name__ == "__main__":
    bs, conv_size, in_c, latent, H, W, k = 2, 8, 8, 16, 16, 16, 3

    key = jax.random.PRNGKey(0)
    ks = jax.random.split(key, 12)

    # kaiming_uniform_(a=sqrt(5)) -> U(-1/sqrt(fan_in), 1/sqrt(fan_in))
    wb1 = 1.0 / math.sqrt(in_c * k * k)
    wb2 = 1.0 / math.sqrt(conv_size * k * k)
    conv1_w = jax.random.uniform(ks[0], (conv_size, in_c, k, k), jnp.float32, -wb1, wb1)
    conv2_w = jax.random.uniform(ks[1], (conv_size, conv_size, k, k), jnp.float32, -wb2, wb2)

    lb = 1.0 / math.sqrt(latent)
    aff1_w = jax.random.uniform(ks[2], (in_c, latent), jnp.float32, -lb, lb)
    aff1_b = jax.random.uniform(ks[3], (in_c,), jnp.float32, -lb, lb)
    aff2_w = jax.random.uniform(ks[4], (conv_size, latent), jnp.float32, -lb, lb)
    aff2_b = jax.random.uniform(ks[5], (conv_size,), jnp.float32, -lb, lb)

    bias1 = 0.1 * jax.random.normal(ks[6], (conv_size,), jnp.float32)
    bias2 = 0.1 * jax.random.normal(ks[7], (conv_size,), jnp.float32)
    nstr1 = jnp.asarray(0.3, jnp.float32)   # AddNoise scalar weight (nonzero to exercise path)
    nstr2 = jnp.asarray(0.2, jnp.float32)

    x_nchw = jax.random.normal(ks[8], (bs, in_c, H, W), jnp.float32)
    w1 = jax.random.normal(ks[9], (bs, latent), jnp.float32)
    w2 = jax.random.normal(ks[10], (bs, latent), jnp.float32)
    noise1 = jax.random.normal(ks[11], (bs, H, W), jnp.float32)
    noise2 = jax.random.normal(jax.random.PRNGKey(1), (bs, H, W), jnp.float32)

    x_nhwc = jnp.transpose(x_nchw, (0, 2, 3, 1))    # one-time boundary layout conversion

    params = dict(conv1_w=conv1_w, aff1_w=aff1_w, aff1_b=aff1_b, nstr1=nstr1, bias1=bias1,
                  conv2_w=conv2_w, aff2_w=aff2_w, aff2_b=aff2_b, nstr2=nstr2, bias2=bias2)

    def run(compute_dtype, use_first_conv, band_rows=None):
        return style_generator_block_nhwc(
            x_nhwc, w1, w2=w2, noise1=noise1, noise2=noise2,
            use_first_conv=use_first_conv,
            conv1_weight=conv1_w, affine1_w=aff1_w, affine1_b=aff1_b,
            noise1_strength=nstr1, bias1=bias1,
            conv2_weight=conv2_w, affine2_w=aff2_w, affine2_b=aff2_b,
            noise2_strength=nstr2, bias2=bias2,
            compute_dtype=compute_dtype, band_rows=band_rows)

    # (a) full two-stage block (use_first_conv=True), f32 MXU path, explicit
    #     4-row bands -> grid (bs, 4), exercising the multi-band path. Tight tol.
    out_f32 = jax.block_until_ready(run(jnp.float32, True, band_rows=4))
    ref_a = jnp.transpose(
        _ref_style_generator_block(x_nchw, w1, w2, noise1, noise2, params, True),
        (0, 2, 3, 1))
    assert out_f32.shape == (bs, H, W, conv_size), out_f32.shape
    err_a = float(jnp.max(jnp.abs(out_f32 - ref_a)))
    assert jnp.allclose(out_f32, ref_a, atol=1e-4, rtol=1e-4), err_a

    # (b) default config (use_first_conv=False), bf16 MXU inputs / f32 accumulation,
    #     auto band selection (single band at this demo size).
    out_bf16 = jax.block_until_ready(run(jnp.bfloat16, False))
    ref_b = jnp.transpose(
        _ref_style_generator_block(x_nchw, w1, w2, noise1, noise2, params, False),
        (0, 2, 3, 1))
    err_b = float(jnp.max(jnp.abs(out_bf16 - ref_b)))
    assert jnp.allclose(out_bf16, ref_b, atol=7e-2, rtol=7e-2), err_b

    print("KERNEL_OK")
</pallas_src>

<mosaic_0001>
module attributes {stable_mosaic.version = 11 : i64} {
  func.func @_fused_stage_kernel(%arg0: i32, %arg1: i32, %arg2: memref<1x1x128xf32, #tpu.memory_space<vmem>>, %arg3: memref<1x1x128xf32, #tpu.memory_space<vmem>>, %arg4: memref<9x128x128xf32, #tpu.memory_space<vmem>>, %arg5: memref<1x18x18x128xf32, #tpu.memory_space<vmem>>, %arg6: memref<1x64x1xf32, #tpu.memory_space<vmem>>, %arg7: memref<1x128xf32, #tpu.memory_space<vmem>>, %arg8: memref<1x64x128xf32, #tpu.memory_space<vmem>>) attributes {dimension_semantics = [#tpu.dimension_semantics<parallel>, #tpu.dimension_semantics<parallel>], iteration_bounds = array<i64: 2, 4>, scalar_prefetch = 0 : i64, scratch_operands = 0 : i64, tpu.core_type = #tpu.core_type<tc>, window_params = [{transform_indices = @transform_0, window_bounds = array<i64: 1, 1, 128>}, {transform_indices = @transform_1, window_bounds = array<i64: 1, 1, 128>}, {pipeline_mode = #tpu.pipeline_mode<synchronous>, transform_indices = @transform_2, window_bounds = array<i64: 9, 128, 128>}, {transform_indices = @transform_3, window_bounds = array<i64: 1, 18, 18, 128>}, {transform_indices = @transform_4, window_bounds = array<i64: 1, 64, 1>}, {pipeline_mode = #tpu.pipeline_mode<synchronous>, transform_indices = @transform_5, window_bounds = array<i64: 1, 128>}, {transform_indices = @transform_6, window_bounds = array<i64: 1, 64, 128>}]} {
    %c4_i32 = arith.constant 4 : i32
    %0 = arith.muli %arg1, %c4_i32 : i32
    %1 = tpu.assume_multiple %0, 4 : i32
    %c0 = arith.constant 0 : index
    %c0_0 = arith.constant 0 : index
    %c0_1 = arith.constant 0 : index
    %2 = vector.load %arg2[%c0, %c0_0, %c0_1] : memref<1x1x128xf32, #tpu.memory_space<vmem>>, vector<1x1x128xf32>
    %3 = vector.shape_cast %2 : vector<1x1x128xf32> to vector<1x128xf32>
    %4 = vector.shape_cast %3 : vector<1x128xf32> to vector<1x1x128xf32>
    %c0_2 = arith.constant 0 : index
    %5 = arith.index_cast %1 : i32 to index
    %c0_3 = arith.constant 0 : index
    %c0_4 = arith.constant 0 : index
    %6 = vector.load %arg5[%c0_2, %5, %c0_3, %c0_4] : memref<1x18x18x128xf32, #tpu.memory_space<vmem>>, vector<1x6x18x128xf32>
    %7 = vector.shape_cast %6 : vector<1x6x18x128xf32> to vector<6x18x128xf32>
    %8 = vector.broadcast %4 : vector<1x1x128xf32> to vector<6x18x128xf32>
    %9 = arith.mulf %7, %8 : vector<6x18x128xf32>
    %cst = arith.constant 0.000000e+00 : f32
    %10 = vector.broadcast %cst : f32 to vector<64x128xf32>
    %11 = vector.extract_strided_slice %9 {offsets = [0, 0, 0], sizes = [6, 16, 128], strides = [1, 1, 1]} : vector<6x18x128xf32> to vector<6x16x128xf32>
    %12 = vector.shape_cast %11 : vector<6x16x128xf32> to vector<96x128xf32>
    %13 = vector.extract_strided_slice %12 {offsets = [0, 0], sizes = [64, 128], strides = [1, 1]} : vector<96x128xf32> to vector<64x128xf32>
    %c0_5 = arith.constant 0 : index
    %c0_6 = arith.constant 0 : index
    %c0_7 = arith.constant 0 : index
    %14 = vector.load %arg4[%c0_5, %c0_6, %c0_7] : memref<9x128x128xf32, #tpu.memory_space<vmem>>, vector<1x128x128xf32>
    %15 = vector.shape_cast %14 : vector<1x128x128xf32> to vector<128x128xf32>
    %cst_8 = arith.constant dense<0.000000e+00> : vector<64x128xf32>
    %16 = tpu.matmul %13, %15, %cst_8 {dimension_numbers = #tpu.dot_dimension_numbers<[1], [0], [0], [1], [0, 0, 1, 1], [], []>} : vector<64x128xf32>, vector<128x128xf32>, vector<64x128xf32> -> vector<64x128xf32>
    %17 = arith.addf %10, %16 : vector<64x128xf32>
    %18 = vector.extract_strided_slice %12 {offsets = [16, 0], sizes = [64, 128], strides = [1, 1]} : vector<96x128xf32> to vector<64x128xf32>
    %c3 = arith.constant 3 : index
    %c0_9 = arith.constant 0 : index
    %c0_10 = arith.constant 0 : index
    %19 = vector.load %arg4[%c3, %c0_9, %c0_10] : memref<9x128x128xf32, #tpu.memory_space<vmem>>, vector<1x128x128xf32>
    %20 = vector.shape_cast %19 : vector<1x128x128xf32> to vector<128x128xf32>
    %cst_11 = arith.constant dense<0.000000e+00> : vector<64x128xf32>
    %21 = tpu.matmul %18, %20, %cst_11 {dimension_numbers = #tpu.dot_dimension_numbers<[1], [0], [0], [1], [0, 0, 1, 1], [], []>} : vector<64x128xf32>, vector<128x128xf32>, vector<64x128xf32> -> vector<64x128xf32>
    %22 = arith.addf %17, %21 : vector<64x128xf32>
    %23 = vector.extract_strided_slice %12 {offsets = [32, 0], sizes = [64, 128], strides = [1, 1]} : vector<96x128xf32> to vector<64x128xf32>
    %c6 = arith.constant 6 : index
    %c0_12 = arith.constant 0 : index
    %c0_13 = arith.constant 0 : index
    %24 = vector.load %arg4[%c6, %c0_12, %c0_13] : memref<9x128x128xf32, #tpu.memory_space<vmem>>, vector<1x128x128xf32>
    %25 = vector.shape_cast %24 : vector<1x128x128xf32> to vector<128x128xf32>
    %cst_14 = arith.constant dense<0.000000e+00> : vector<64x128xf32>
    %26 = tpu.matmul %23, %25, %cst_14 {dimension_numbers = #tpu.dot_dimension_numbers<[1], [0], [0], [1], [0, 0, 1, 1], [], []>} : vector<64x128xf32>, vector<128x128xf32>, vector<64x128xf32> -> vector<64x128xf32>
    %27 = arith.addf %22, %26 : vector<64x128xf32>
    %28 = vector.extract_strided_slice %9 {offsets = [0, 1, 0], sizes = [6, 16, 128], strides = [1, 1, 1]} : vector<6x18x128xf32> to vector<6x16x128xf32>
    %29 = vector.shape_cast %28 : vector<6x16x128xf32> to vector<96x128xf32>
    %30 = vector.extract_strided_slice %29 {offsets = [0, 0], sizes = [64, 128], strides = [1, 1]} : vector<96x128xf32> to vector<64x128xf32>
    %c1 = arith.constant 1 : index
    %c0_15 = arith.constant 0 : index
    %c0_16 = arith.constant 0 : index
    %31 = vector.load %arg4[%c1, %c0_15, %c0_16] : memref<9x128x128xf32, #tpu.memory_space<vmem>>, vector<1x128x128xf32>
    %32 = vector.shape_cast %31 : vector<1x128x128xf32> to vector<128x128xf32>
    %cst_17 = arith.constant dense<0.000000e+00> : vector<64x128xf32>
    %33 = tpu.matmul %30, %32, %cst_17 {dimension_numbers = #tpu.dot_dimension_numbers<[1], [0], [0], [1], [0, 0, 1, 1], [], []>} : vector<64x128xf32>, vector<128x128xf32>, vector<64x128xf32> -> vector<64x128xf32>
    %34 = arith.addf %27, %33 : vector<64x128xf32>
    %35 = vector.extract_strided_slice %29 {offsets = [16, 0], sizes = [64, 128], strides = [1, 1]} : vector<96x128xf32> to vector<64x128xf32>
    %c4 = arith.constant 4 : index
    %c0_18 = arith.constant 0 : index
    %c0_19 = arith.constant 0 : index
    %36 = vector.load %arg4[%c4, %c0_18, %c0_19] : memref<9x128x128xf32, #tpu.memory_space<vmem>>, vector<1x128x128xf32>
    %37 = vector.shape_cast %36 : vector<1x128x128xf32> to vector<128x128xf32>
    %cst_20 = arith.constant dense<0.000000e+00> : vector<64x128xf32>
    %38 = tpu.matmul %35, %37, %cst_20 {dimension_numbers = #tpu.dot_dimension_numbers<[1], [0], [0], [1], [0, 0, 1, 1], [], []>} : vector<64x128xf32>, vector<128x128xf32>, vector<64x128xf32> -> vector<64x128xf32>
    %39 = arith.addf %34, %38 : vector<64x128xf32>
    %40 = vector.extract_strided_slice %29 {offsets = [32, 0], sizes = [64, 128], strides = [1, 1]} : vector<96x128xf32> to vector<64x128xf32>
    %c7 = arith.constant 7 : index
    %c0_21 = arith.constant 0 : index
    %c0_22 = arith.constant 0 : index
    %41 = vector.load %arg4[%c7, %c0_21, %c0_22] : memref<9x128x128xf32, #tpu.memory_space<vmem>>, vector<1x128x128xf32>
    %42 = vector.shape_cast %41 : vector<1x128x128xf32> to vector<128x128xf32>
    %cst_23 = arith.constant dense<0.000000e+00> : vector<64x128xf32>
    %43 = tpu.matmul %40, %42, %cst_23 {dimension_numbers = #tpu.dot_dimension_numbers<[1], [0], [0], [1], [0, 0, 1, 1], [], []>} : vector<64x128xf32>, vector<128x128xf32>, vector<64x128xf32> -> vector<64x128xf32>
    %44 = arith.addf %39, %43 : vector<64x128xf32>
    %45 = vector.extract_strided_slice %9 {offsets = [0, 2, 0], sizes = [6, 16, 128], strides = [1, 1, 1]} : vector<6x18x128xf32> to vector<6x16x128xf32>
    %46 = vector.shape_cast %45 : vector<6x16x128xf32> to vector<96x128xf32>
    %47 = vector.extract_strided_slice %46 {offsets = [0, 0], sizes = [64, 128], strides = [1, 1]} : vector<96x128xf32> to vector<64x128xf32>
    %c2 = arith.constant 2 : index
    %c0_24 = arith.constant 0 : index
    %c0_25 = arith.constant 0 : index
    %48 = vector.load %arg4[%c2, %c0_24, %c0_25] : memref<9x128x128xf32, #tpu.memory_space<vmem>>, vector<1x128x128xf32>
    %49 = vector.shape_cast %48 : vector<1x128x128xf32> to vector<128x128xf32>
    %cst_26 = arith.constant dense<0.000000e+00> : vector<64x128xf32>
    %50 = tpu.matmul %47, %49, %cst_26 {dimension_numbers = #tpu.dot_dimension_numbers<[1], [0], [0], [1], [0, 0, 1, 1], [], []>} : vector<64x128xf32>, vector<128x128xf32>, vector<64x128xf32> -> vector<64x128xf32>
    %51 = arith.addf %44, %50 : vector<64x128xf32>
    %52 = vector.extract_strided_slice %46 {offsets = [16, 0], sizes = [64, 128], strides = [1, 1]} : vector<96x128xf32> to vector<64x128xf32>
    %c5 = arith.constant 5 : index
    %c0_27 = arith.constant 0 : index
    %c0_28 = arith.constant 0 : index
    %53 = vector.load %arg4[%c5, %c0_27, %c0_28] : memref<9x128x128xf32, #tpu.memory_space<vmem>>, vector<1x128x128xf32>
    %54 = vector.shape_cast %53 : vector<1x128x128xf32> to vector<128x128xf32>
    %cst_29 = arith.constant dense<0.000000e+00> : vector<64x128xf32>
    %55 = tpu.matmul %52, %54, %cst_29 {dimension_numbers = #tpu.dot_dimension_numbers<[1], [0], [0], [1], [0, 0, 1, 1], [], []>} : vector<64x128xf32>, vector<128x128xf32>, vector<64x128xf32> -> vector<64x128xf32>
    %56 = arith.addf %51, %55 : vector<64x128xf32>
    %57 = vector.extract_strided_slice %46 {offsets = [32, 0], sizes = [64, 128], strides = [1, 1]} : vector<96x128xf32> to vector<64x128xf32>
    %c8 = arith.constant 8 : index
    %c0_30 = arith.constant 0 : index
    %c0_31 = arith.constant 0 : index
    %58 = vector.load %arg4[%c8, %c0_30, %c0_31] : memref<9x128x128xf32, #tpu.memory_space<vmem>>, vector<1x128x128xf32>
    %59 = vector.shape_cast %58 : vector<1x128x128xf32> to vector<128x128xf32>
    %cst_32 = arith.constant dense<0.000000e+00> : vector<64x128xf32>
    %60 = tpu.matmul %57, %59, %cst_32 {dimension_numbers = #tpu.dot_dimension_numbers<[1], [0], [0], [1], [0, 0, 1, 1], [], []>} : vector<64x128xf32>, vector<128x128xf32>, vector<64x128xf32> -> vector<64x128xf32>
    %61 = arith.addf %56, %60 : vector<64x128xf32>
    %c0_33 = arith.constant 0 : index
    %c0_34 = arith.constant 0 : index
    %c0_35 = arith.constant 0 : index
    %62 = vector.load %arg3[%c0_33, %c0_34, %c0_35] : memref<1x1x128xf32, #tpu.memory_space<vmem>>, vector<1x1x128xf32>
    %63 = vector.shape_cast %62 : vector<1x1x128xf32> to vector<1x128xf32>
    %64 = vector.broadcast %63 : vector<1x128xf32> to vector<64x128xf32>
    %65 = arith.mulf %61, %64 : vector<64x128xf32>
    %c0_36 = arith.constant 0 : index
    %c0_37 = arith.constant 0 : index
    %c0_38 = arith.constant 0 : index
    %66 = vector.load %arg6[%c0_36, %c0_37, %c0_38] : memref<1x64x1xf32, #tpu.memory_space<vmem>>, vector<1x64x1xf32>
    %67 = vector.shape_cast %66 : vector<1x64x1xf32> to vector<64x1xf32>
    %68 = vector.broadcast %67 : vector<64x1xf32> to vector<64x128xf32>
    %69 = arith.addf %65, %68 : vector<64x128xf32>
    %c0_39 = arith.constant 0 : index
    %c0_40 = arith.constant 0 : index
    %70 = vector.load %arg7[%c0_39, %c0_40] : memref<1x128xf32, #tpu.memory_space<vmem>>, vector<1x128xf32>
    %71 = vector.broadcast %70 : vector<1x128xf32> to vector<64x128xf32>
    %72 = arith.addf %69, %71 : vector<64x128xf32>
    %cst_41 = arith.constant 0.000000e+00 : f32
    %73 = vector.broadcast %cst_41 : f32 to vector<64x128xf32>
    %74 = arith.cmpf oge, %72, %73 : vector<64x128xf32>
    %cst_42 = arith.constant 2.000000e-01 : f32
    %75 = vector.broadcast %cst_42 : f32 to vector<64x128xf32>
    %76 = arith.mulf %75, %72 : vector<64x128xf32>
    %77 = arith.select %74, %72, %76 : vector<64x128xi1>, vector<64x128xf32>
    %cst_43 = arith.constant 1.41421354 : f32
    %78 = vector.broadcast %cst_43 : f32 to vector<64x128xf32>
    %79 = arith.mulf %77, %78 : vector<64x128xf32>
    %80 = tpu.iota {dimensions = array<i32: 1>} : vector<1x128xi32>
    %c8_i32 = arith.constant 8 : i32
    %81 = vector.broadcast %c8_i32 : i32 to vector<1x128xi32>
    %82 = arith.cmpi slt, %80, %81 : vector<1x128xi32>
    %cst_44 = arith.constant 0.000000e+00 : f32
    %83 = vector.shape_cast %82 : vector<1x128xi1> to vector<1x128xi1>
    %84 = vector.broadcast %83 : vector<1x128xi1> to vector<64x128xi1>
    %85 = vector.broadcast %cst_44 : f32 to vector<64x128xf32>
    %86 = arith.select %84, %79, %85 : vector<64x128xi1>, vector<64x128xf32>
    %c0_45 = arith.constant 0 : index
    %c0_46 = arith.constant 0 : index
    %c0_47 = arith.constant 0 : index
    %87 = vector.load %arg8[%c0_45, %c0_46, %c0_47] : memref<1x64x128xf32, #tpu.memory_space<vmem>>, vector<1x64x128xf32>
    %88 = vector.shape_cast %87 : vector<1x64x128xf32> to vector<64x128xf32>
    %89 = vector.shape_cast %86 : vector<64x128xf32> to vector<1x64x128xf32>
    tpu.vector_store %arg8[%c0_45, %c0_46, %c0_47], %89 {strides = array<i32>} : memref<1x64x128xf32, #tpu.memory_space<vmem>>, vector<1x64x128xf32>,
    return
  }
  func.func @transform_0(%arg0: i32, %arg1: i32) -> (i32, i32, i32) {
    %c0_i32 = arith.constant 0 : i32
    %c0_i32_0 = arith.constant 0 : i32
    %c0_i32_1 = arith.constant 0 : i32
    return %arg0, %c0_i32, %c0_i32_0 : i32, i32, i32
  }
  func.func @transform_1(%arg0: i32, %arg1: i32) -> (i32, i32, i32) {
    %c0_i32 = arith.constant 0 : i32
    %c0_i32_0 = arith.constant 0 : i32
    %c0_i32_1 = arith.constant 0 : i32
    return %arg0, %c0_i32, %c0_i32_0 : i32, i32, i32
  }
  func.func @transform_2(%arg0: i32, %arg1: i32) -> (i32, i32, i32) {
    %c0_i32 = arith.constant 0 : i32
    %c0_i32_0 = arith.constant 0 : i32
    %c0_i32_1 = arith.constant 0 : i32
    %c0_i32_2 = arith.constant 0 : i32
    return %c0_i32, %c0_i32_0, %c0_i32_1 : i32, i32, i32
  }
  func.func @transform_3(%arg0: i32, %arg1: i32) -> (i32, i32, i32, i32) {
    %c0_i32 = arith.constant 0 : i32
    %c0_i32_0 = arith.constant 0 : i32
    %c0_i32_1 = arith.constant 0 : i32
    %c0_i32_2 = arith.constant 0 : i32
    return %arg0, %c0_i32, %c0_i32_0, %c0_i32_1 : i32, i32, i32, i32
  }
  func.func @transform_4(%arg0: i32, %arg1: i32) -> (i32, i32, i32) {
    %c0_i32 = arith.constant 0 : i32
    %c0_i32_0 = arith.constant 0 : i32
    return %arg0, %arg1, %c0_i32 : i32, i32, i32
  }
  func.func @transform_5(%arg0: i32, %arg1: i32) -> (i32, i32) {
    %c0_i32 = arith.constant 0 : i32
    %c0_i32_0 = arith.constant 0 : i32
    %c0_i32_1 = arith.constant 0 : i32
    return %c0_i32, %c0_i32_0 : i32, i32
  }
  func.func @transform_6(%arg0: i32, %arg1: i32) -> (i32, i32, i32) {
    %c0_i32 = arith.constant 0 : i32
    %c0_i32_0 = arith.constant 0 : i32
    return %arg0, %arg1, %c0_i32 : i32, i32, i32
  }
}

</mosaic_0001>

<llo_original>
// kernel: tpu_custom_call.1
$region0: #{tpu_custom_call.1}
  #allocation0 [shape = 'u32[]', space=smem, size = 0x4, offset = 0x4, fixed_abs, tag = 'smem constant byte address 0x4 - core index']
  #allocation1 [shape = 'u32[144,128]{1,0:T(1,128)}', space=vmem, size = 0x12000, scoped, tag = 'internal scratch']
  %s0 = inlined_call_operand.vmem [shape: f32[2,1,128], index: 0, kind: input, shape index: {}]
  %s1 = inlined_call_operand.vmem [shape: f32[2,1,128], index: 1, kind: input, shape index: {}]
  %s2 = inlined_call_operand.vmem [shape: f32[9,128,128], index: 2, kind: input, shape index: {}]
  %s3 = inlined_call_operand.vmem [shape: f32[2,18,18,128], index: 3, kind: input, shape index: {}]
  %s4 = inlined_call_operand.vmem [shape: f32[2,256,1], index: 4, kind: input, shape index: {}]
  %s5 = inlined_call_operand.vmem [shape: f32[1,128], index: 5, kind: input, shape index: {}]
  %s6 = inlined_call_operand.hbm [shape: f32[2,256,128], index: 6, kind: output, shape index: {}]
  %s7 = sld [smem:[#allocation0]]
  $region57: #{tpu_custom_call.1} parent=0
    _
  %s9 = ssub.s32 1, %s7
  %s10 = scalar_select 0, %s9, %s7
  $region1: #{tpu_custom_call.1} parent=0
    #allocation2 [shape = 'u8[65536]{0}', space=vmem, size = 0x10000, scoped, tag = 'output window, operand 0']
    #allocation3 [shape = 's32[2]{0}', space=sflag, size = 0x8, scoped, tag = 'scoped memory for tpu_custom_call.1']
    %11 = vsyncpa [#allocation3], 0
    %s12 = scalar_lea.sflag [#allocation3], 1
    %13 = vsyncpa %s12, 0
    loop: start=0, step=1, limit=10
    $region2: #{tpu_custom_call.1} parent=1 // loop_pre_header
      _
    $region3: #{tpu_custom_call.1} parent=1 // loop_header
      %s15 = sphi 0, %s19
      %p16 = scmp.ge.s32.totalorder %s15, 10
      %s22 = sphi 0, %s34
      %s23 = sphi 0, %s30
      %s24 = sphi 0, %s22
      %s25 = sphi 0, %s23
      %s26 = sphi 0, %s24
      %s27 = sphi 0, %s25
      %s37 = sphi 0, %s39
      %s40 = sphi 0, %s37
      %s41 = sphi 0, %s40
      %s57 = sphi 0, %s41
      %s63 = sphi 0, %s65
      %s66 = sphi 0, %s63
      %s67 = sphi 0, %s66
      %s83 = sphi 0, %s67
      %s87 = sphi 0, %s87
      %s89 = sphi 0, %s87
      %s90 = sphi 0, %s89
      %s104 = sphi 0, %s90
      %s110 = sphi 0, %s112
      %s113 = sphi 0, %s110
      %s114 = sphi 0, %s113
      %s130 = sphi 0, %s114
      %s138 = sphi 0, %s140
      %s141 = sphi 0, %s138
      %s142 = sphi 0, %s141
      %s158 = sphi 0, %s142
      %s162 = sphi 0, %s162
      %s164 = sphi 0, %s162
      %s165 = sphi 0, %s164
      %s179 = sphi 0, %s165
      %s187 = sphi 0, %s189
      %s190 = sphi 0, %s187
      %s191 = sphi 0, %s190
      %s207 = sphi 0, %s191
    $region4: #{tpu_custom_call.1} parent=1 // loop_header_branch
      %18 = sbr.rel (%p16) target = $region8
    $region5: #{tpu_custom_call.1} parent=1 // loop_body
      %s20 = ssub.s32 %s15, 1
      %s21 = ssub.s32 %s15, 2
      %s28 = sadd.s32 1, %s23
      %p29 = scmp.ge.s32.totalorder %s28, 4
      %s30 = scalar_select %p29, 0, %s28
      %s31 = sadd.s32 1, %s22
      %s32 = scalar_select %p29, %s31, %s22
      %p33 = scmp.ge.s32.totalorder %s32, 2
      %s34 = scalar_select %p33, 0, %s32
      %s35 = ssub.s32 %s22, %s34
      %p36 = scmp.eq.s32.totalorder %s35, 0
      %s38 = sadd.s32 %s37, 1
      %s39 = scalar_select %p36, %s37, %s38
      %p42 = pneg %p36
      %p43 = scmp.eq.s32.totalorder %s15, 7
      %p44 = por %p42, %p43
      %p45 = scmp.ne.s32.totalorder %s37, %s40
      %p46 = scmp.eq.s32.totalorder %s15, 0
      %p47 = por %p45, %p46
      %p48 = scmp.ne.s32.totalorder %s37, %s40
      %p49 = scmp.eq.s32.totalorder %s20, 7
      %p50 = por %p48, %p49
      %p51 = scmp.ne.s32.totalorder %s40, %s41
      %p52 = scmp.eq.s32.totalorder %s20, 0
      %p53 = por %p51, %p52
      %p54 = scmp.ne.s32.totalorder %s40, %s41
      %p55 = scmp.eq.s32.totalorder %s21, 7
      %p56 = por %p54, %p55
      %p58 = scmp.ne.s32.totalorder %s41, %s57
      %p59 = scmp.eq.s32.totalorder %s21, 0
      %p60 = por %p58, %p59
      %s61 = ssub.s32 %s22, %s34
      %p62 = scmp.eq.s32.totalorder %s61, 0
      %s64 = sadd.s32 %s63, 1
      %s65 = scalar_select %p62, %s63, %s64
      %p68 = pneg %p62
      %p69 = scmp.eq.s32.totalorder %s15, 7
      %p70 = por %p68, %p69
      %p71 = scmp.ne.s32.totalorder %s63, %s66
      %p72 = scmp.eq.s32.totalorder %s15, 0
      %p73 = por %p71, %p72
      %p74 = scmp.ne.s32.totalorder %s63, %s66
      %p75 = scmp.eq.s32.totalorder %s20, 7
      %p76 = por %p74, %p75
      %p77 = scmp.ne.s32.totalorder %s66, %s67
      %p78 = scmp.eq.s32.totalorder %s20, 0
      %p79 = por %p77, %p78
      %p80 = scmp.ne.s32.totalorder %s66, %s67
      %p81 = scmp.eq.s32.totalorder %s21, 7
      %p82 = por %p80, %p81
      %p84 = scmp.ne.s32.totalorder %s67, %s83
      %p85 = scmp.eq.s32.totalorder %s21, 0
      %p86 = por %p84, %p85
      %s88 = sadd.s32 %s87, 1
      %p91 = scmp.eq.s32.totalorder %s15, 7
      %p92 = scmp.ne.s32.totalorder %s87, %s89
      %p93 = scmp.eq.s32.totalorder %s15, 0
      %p94 = por %p92, %p93
      %p95 = scmp.ne.s32.totalorder %s87, %s89
      %p96 = scmp.eq.s32.totalorder %s20, 7
      %p97 = por %p95, %p96
      %p98 = scmp.ne.s32.totalorder %s89, %s90
      %p99 = scmp.eq.s32.totalorder %s20, 0
      %p100 = por %p98, %p99
      %p101 = scmp.ne.s32.totalorder %s89, %s90
      %p102 = scmp.eq.s32.totalorder %s21, 7
      %p103 = por %p101, %p102
      %p105 = scmp.ne.s32.totalorder %s90, %s104
      %p106 = scmp.eq.s32.totalorder %s21, 0
      %p107 = por %p105, %p106
      %s108 = ssub.s32 %s22, %s34
      %p109 = scmp.eq.s32.totalorder %s108, 0
      %s111 = sadd.s32 %s110, 1
      %s112 = scalar_select %p109, %s110, %s111
      %p115 = pneg %p109
      %p116 = scmp.eq.s32.totalorder %s15, 7
      %p117 = por %p115, %p116
      %p118 = scmp.ne.s32.totalorder %s110, %s113
      %p119 = scmp.eq.s32.totalorder %s15, 0
      %p120 = por %p118, %p119
      %p121 = scmp.ne.s32.totalorder %s110, %s113
      %p122 = scmp.eq.s32.totalorder %s20, 7
      %p123 = por %p121, %p122
      %p124 = scmp.ne.s32.totalorder %s113, %s114
      %p125 = scmp.eq.s32.totalorder %s20, 0
      %p126 = por %p124, %p125
      %p127 = scmp.ne.s32.totalorder %s113, %s114
      %p128 = scmp.eq.s32.totalorder %s21, 7
      %p129 = por %p127, %p128
      %p131 = scmp.ne.s32.totalorder %s114, %s130
      %p132 = scmp.eq.s32.totalorder %s21, 0
      %p133 = por %p131, %p132
      %s134 = ssub.s32 %s22, %s34
      %s135 = ssub.s32 %s23, %s30
      %s136 = sor.u32 %s134, %s135
      %p137 = scmp.eq.s32.totalorder %s136, 0
      %s139 = sadd.s32 %s138, 1
      %s140 = scalar_select %p137, %s138, %s139
      %p143 = pneg %p137
      %p144 = scmp.eq.s32.totalorder %s15, 7
      %p145 = por %p143, %p144
      %p146 = scmp.ne.s32.totalorder %s138, %s141
      %p147 = scmp.eq.s32.totalorder %s15, 0
      %p148 = por %p146, %p147
      %p149 = scmp.ne.s32.totalorder %s138, %s141
      %p150 = scmp.eq.s32.totalorder %s20, 7
      %p151 = por %p149, %p150
      %p152 = scmp.ne.s32.totalorder %s141, %s142
      %p153 = scmp.eq.s32.totalorder %s20, 0
      %p154 = por %p152, %p153
      %p155 = scmp.ne.s32.totalorder %s141, %s142
      %p156 = scmp.eq.s32.totalorder %s21, 7
      %p157 = por %p155, %p156
      %p159 = scmp.ne.s32.totalorder %s142, %s158
      %p160 = scmp.eq.s32.totalorder %s21, 0
      %p161 = por %p159, %p160
      %s163 = sadd.s32 %s162, 1
      %p166 = scmp.eq.s32.totalorder %s15, 7
      %p167 = scmp.ne.s32.totalorder %s162, %s164
      %p168 = scmp.eq.s32.totalorder %s15, 0
      %p169 = por %p167, %p168
      %p170 = scmp.ne.s32.totalorder %s162, %s164
      %p171 = scmp.eq.s32.totalorder %s20, 7
      %p172 = por %p170, %p171
      %p173 = scmp.ne.s32.totalorder %s164, %s165
      %p174 = scmp.eq.s32.totalorder %s20, 0
      %p175 = por %p173, %p174
      %p176 = scmp.ne.s32.totalorder %s164, %s165
      %p177 = scmp.eq.s32.totalorder %s21, 7
      %p178 = por %p176, %p177
      %p180 = scmp.ne.s32.totalorder %s165, %s179
      %p181 = scmp.eq.s32.totalorder %s21, 0
      %p182 = por %p180, %p181
      %s183 = ssub.s32 %s22, %s34
      %s184 = ssub.s32 %s23, %s30
      %s185 = sor.u32 %s183, %s184
      %p186 = scmp.eq.s32.totalorder %s185, 0
      %s188 = sadd.s32 %s187, 1
      %s189 = scalar_select %p186, %s187, %s188
      %p192 = pneg %p186
      %p193 = scmp.eq.s32.totalorder %s15, 7
      %p194 = por %p192, %p193
      %p195 = scmp.ne.s32.totalorder %s187, %s190
      %p196 = scmp.eq.s32.totalorder %s15, 0
      %p197 = por %p195, %p196
      %p198 = scmp.ne.s32.totalorder %s187, %s190
      %p199 = scmp.eq.s32.totalorder %s20, 7
      %p200 = por %p198, %p199
      %p201 = scmp.ne.s32.totalorder %s190, %s191
      %p202 = scmp.eq.s32.totalorder %s20, 0
      %p203 = por %p201, %p202
      %p204 = scmp.ne.s32.totalorder %s190, %s191
      %p205 = scmp.eq.s32.totalorder %s21, 7
      %p206 = por %p204, %p205
      %p208 = scmp.ne.s32.totalorder %s191, %s207
      %p209 = scmp.eq.s32.totalorder %s21, 0
      %p210 = por %p208, %p209
      %p211 = scmp.le.s32.totalorder 1, %s15
      %p212 = scmp.lt.s32.totalorder %s15, 9
      %p213 = pnand %p211, %p212
      %p214 = pneg %p213
      // Predicated region
      $region9: #{tpu_custom_call.1} parent=5 // pred_check
        _
      $region10: #{tpu_custom_call.1} parent=5 // pred_check_branch
        %216 = sbr.rel (%p213) target = $region12
      $region11: #{tpu_custom_call.1} parent=5 // pred_region
        %s217 = ssub.s32 %s15, 1
        // Predicated region
        $region13: #{tpu_custom_call.1} parent=11 // pred_check
          %p218 = pneg %p100
        $region14: #{tpu_custom_call.1} parent=11 // pred_check_branch
          %220 = sbr.rel (%p218) target = $region16
        $region15: #{tpu_custom_call.1} parent=11 // pred_region
          _
        $region16: #{tpu_custom_call.1} parent=11 // pred_fallthru
          _
        // Predicated region
        $region17: #{tpu_custom_call.1} parent=11 // pred_check
          %p221 = pneg %p175
        $region18: #{tpu_custom_call.1} parent=11 // pred_check_branch
          %223 = sbr.rel (%p221) target = $region20
        $region19: #{tpu_custom_call.1} parent=11 // pred_region
          _
        $region20: #{tpu_custom_call.1} parent=11 // pred_fallthru
          _
      $region12: #{tpu_custom_call.1} parent=5 // pred_fallthru
        _
      %p224 = scmp.lt.s32.totalorder %s15, 8
      // Predicated region
      $region21: #{tpu_custom_call.1} parent=5 // pred_check
        %p225 = pneg %p224
      $region22: #{tpu_custom_call.1} parent=5 // pred_check_branch
        %227 = sbr.rel (%p225) target = $region24
      $region23: #{tpu_custom_call.1} parent=5 // pred_region
        // Predicated region
        $region25: #{tpu_custom_call.1} parent=23 // pred_check
          %p228 = pneg %p47
        $region26: #{tpu_custom_call.1} parent=23 // pred_check_branch
          %230 = sbr.rel (%p228) target = $region28
        $region27: #{tpu_custom_call.1} parent=23 // pred_region
          %p231 = scmp.lt.s32.totalorder %s22, 1
          %s232 = scalar_select %p231, %s22, 1
          %s233 = scalar_lea.vmem %s0, %s232
        $region28: #{tpu_custom_call.1} parent=23 // pred_fallthru
          _
        // Predicated region
        $region29: #{tpu_custom_call.1} parent=23 // pred_check
          %p234 = pneg %p73
        $region30: #{tpu_custom_call.1} parent=23 // pred_check_branch
          %236 = sbr.rel (%p234) target = $region32
        $region31: #{tpu_custom_call.1} parent=23 // pred_region
          %p237 = scmp.lt.s32.totalorder %s22, 1
          %s238 = scalar_select %p237, %s22, 1
          %s239 = scalar_lea.vmem %s1, %s238
        $region32: #{tpu_custom_call.1} parent=23 // pred_fallthru
          _
        // Predicated region
        $region33: #{tpu_custom_call.1} parent=23 // pred_check
          %p240 = pneg %p120
        $region34: #{tpu_custom_call.1} parent=23 // pred_check_branch
          %242 = sbr.rel (%p240) target = $region36
        $region35: #{tpu_custom_call.1} parent=23 // pred_region
          %p243 = scmp.lt.s32.totalorder %s22, 1
          %s244 = scalar_select %p243, %s22, 1
          %s245 = smul.addr %s244, 54
          %s246 = smul.addr %s245, 8
          %s247 = scalar_lea.vmem %s3, %s246
        $region36: #{tpu_custom_call.1} parent=23 // pred_fallthru
          _
        // Predicated region
        $region37: #{tpu_custom_call.1} parent=23 // pred_check
          %p248 = pneg %p148
        $region38: #{tpu_custom_call.1} parent=23 // pred_check_branch
          %250 = sbr.rel (%p248) target = $region40
        $region39: #{tpu_custom_call.1} parent=23 // pred_region
          %s251 = smul.u32 8, %s23
          %p252 = scmp.lt.s32.totalorder %s22, 1
          %s253 = scalar_select %p252, %s22, 1
          %p254 = scmp.lt.s32.totalorder %s251, 31
          %s255 = scalar_select %p254, %s251, 31
          %s256 = smul.addr %s253, 32
          %s257 = sadd.s32 %s255, %s256
          %s258 = smul.addr %s257, 8
          %s259 = scalar_lea.vmem %s4, %s258
          %s260 = smul.u32 8, %s23
        $region40: #{tpu_custom_call.1} parent=23 // pred_fallthru
          _
      $region24: #{tpu_custom_call.1} parent=5 // pred_fallthru
        _
      %p261 = scmp.le.s32.totalorder 1, %s15
      %p262 = scmp.lt.s32.totalorder %s15, 9
      %p263 = pnand %p261, %p262
      %p264 = pneg %p263
      // Predicated region
      $region41: #{tpu_custom_call.1} parent=5 // pred_check
        _
      $region42: #{tpu_custom_call.1} parent=5 // pred_check_branch
        %266 = sbr.rel (%p263) target = $region44
      $region43: #{tpu_custom_call.1} parent=5 // pred_region
        %s267 = ssub.s32 %s15, 1
        %p268 = scmp.lt.s32.totalorder %s24, 1
        %s269 = scalar_select %p268, %s24, 1
        %s270 = scalar_lea.vmem %s0, %s269
        %p271 = pneg %p53
        %p272 = pneg %p50
        %p273 = scmp.lt.s32.totalorder %s24, 1
        %s274 = scalar_select %p273, %s24, 1
        %s275 = scalar_lea.vmem %s1, %s274
        %p276 = pneg %p79
        %p277 = pneg %p76
        %p278 = pneg %p100
        %p279 = pneg %p97
        %p280 = scmp.lt.s32.totalorder %s24, 1
        %s281 = scalar_select %p280, %s24, 1
        %s282 = smul.addr %s281, 54
        %s283 = smul.addr %s282, 8
        %s284 = scalar_lea.vmem %s3, %s283
        %p285 = pneg %p126
        %p286 = pneg %p123
        %s287 = smul.u32 8, %s25
        %p288 = scmp.lt.s32.totalorder %s24, 1
        %s289 = scalar_select %p288, %s24, 1
        %p290 = scmp.lt.s32.totalorder %s287, 31
        %s291 = scalar_select %p290, %s287, 31
        %s292 = smul.addr %s289, 32
        %s293 = sadd.s32 %s291, %s292
        %s294 = smul.addr %s293, 8
        %s295 = scalar_lea.vmem %s4, %s294
        %p296 = pneg %p154
        %p297 = pneg %p151
        %p298 = pneg %p175
        %p299 = pneg %p172
        %p300 = pneg %p203
        %p301 = pneg %p200
        %s302 = sand.u32 %s190, 1
        %s303 = scalar_lea.sflag [#allocation3], %s302
        %s304 = sand.u32 %s190, 1
        %s305 = smul.addr %s304, 64
        %s306 = scalar_lea.vmem [#allocation2], %s305
        %p307 = scmp.lt.s32.totalorder %s24, 1
        %s308 = scalar_select %p307, %s24, 1
        %s309 = scalar_lea.vmem %s0, %s308
        %p310 = scmp.lt.s32.totalorder %s24, 1
        %s311 = scalar_select %p310, %s24, 1
        %s312 = scalar_lea.vmem %s1, %s311
        %p313 = scmp.lt.s32.totalorder %s24, 1
        %s314 = scalar_select %p313, %s24, 1
        %s315 = smul.addr %s314, 54
        %s316 = smul.addr %s315, 8
        %s317 = scalar_lea.vmem %s3, %s316
        %s318 = smul.u32 8, %s25
        %p319 = scmp.lt.s32.totalorder %s24, 1
        %s320 = scalar_select %p319, %s24, 1
        %p321 = scmp.lt.s32.totalorder %s318, 31
        %s322 = scalar_select %p321, %s318, 31
        %s323 = smul.addr %s320, 32
        %s324 = sadd.s32 %s322, %s323
        %s325 = smul.addr %s324, 8
        %s326 = scalar_lea.vmem %s4, %s325
        %s327 = smul.u32 8, %s25
        %s328 = smul.u32 8, %s25
        %s329 = smul.u32 %s25, 4
        %v330 = vld [vmem:[%s309] sm:$0x1]
        %s331 = smul.u32 %s329, 24
        %s332 = scalar_lea.vmem %s317, %s331
        %v333 = vld [vmem:[%s332] sm:$0xff]
        %v334 = vld [vmem:[%s332 + $0x8] sm:$0xff]
        %v335 = vld [vmem:[%s332 + $0x10] sm:$0x3]
        %v336 = vld [vmem:[%s332 + $0x18] sm:$0xff]
        %v337 = vld [vmem:[%s332 + $0x20] sm:$0xff]
        %v338 = vld [vmem:[%s332 + $0x28] sm:$0x3]
        %v339 = vld [vmem:[%s332 + $0x30] sm:$0xff]
        %v340 = vld [vmem:[%s332 + $0x38] sm:$0xff]
        %v341 = vld [vmem:[%s332 + $0x40] sm:$0x3]
        %v342 = vld [vmem:[%s332 + $0x48] sm:$0xff]
        %v343 = vld [vmem:[%s332 + $0x50] sm:$0xff]
        %v344 = vld [vmem:[%s332 + $0x58] sm:$0x3]
        %v345 = vld [vmem:[%s332 + $0x60] sm:$0xff]
        %v346 = vld [vmem:[%s332 + $0x68] sm:$0xff]
        %v347 = vld [vmem:[%s332 + $0x70] sm:$0x3]
        %v348 = vld [vmem:[%s332 + $0x78] sm:$0xff]
        %v349 = vld [vmem:[%s332 + $0x80] sm:$0xff]
        %v350 = vld [vmem:[%s332 + $0x88] sm:$0x3]
        %v352 = vlaneseq
        %v353 = vshrl.u32 %v352, 7
        %v354 = vsub.s32 0, %v353
        %v355 = vrot.slane %v330, %v354
        %v357 = vmul.f32 %v333, %v355
        %v358 = vmul.f32 %v334, %v355
        %v359 = vmul.f32 %v335, %v355
        %v360 = vmul.f32 %v336, %v355
        %v361 = vmul.f32 %v337, %v355
        %v362 = vmul.f32 %v338, %v355
        %v363 = vmul.f32 %v339, %v355
        %v364 = vmul.f32 %v340, %v355
        %v365 = vmul.f32 %v341, %v355
        %v366 = vmul.f32 %v342, %v355
        %v367 = vmul.f32 %v343, %v355
        %v368 = vmul.f32 %v344, %v355
        %v369 = vmul.f32 %v345, %v355
        %v370 = vmul.f32 %v346, %v355
        %v371 = vmul.f32 %v347, %v355
        %v372 = vmul.f32 %v348, %v355
        %v373 = vmul.f32 %v349, %v355
        %v374 = vmul.f32 %v350, %v355
        %v375 = vld [vmem:[%s2] sm:$0xff]
        %v376 = vld [vmem:[%s2 + $0x8] sm:$0xff]
        %v377 = vld [vmem:[%s2 + $0x10] sm:$0xff]
        %v378 = vld [vmem:[%s2 + $0x18] sm:$0xff]
        %v379 = vld [vmem:[%s2 + $0x20] sm:$0xff]
        %v380 = vld [vmem:[%s2 + $0x28] sm:$0xff]
        %v381 = vld [vmem:[%s2 + $0x30] sm:$0xff]
        %v382 = vld [vmem:[%s2 + $0x38] sm:$0xff]
        %v383 = vld [vmem:[%s2 + $0x40] sm:$0xff]
        %v384 = vld [vmem:[%s2 + $0x48] sm:$0xff]
        %v385 = vld [vmem:[%s2 + $0x50] sm:$0xff]
        %v386 = vld [vmem:[%s2 + $0x58] sm:$0xff]
        %v387 = vld [vmem:[%s2 + $0x60] sm:$0xff]
        %v388 = vld [vmem:[%s2 + $0x68] sm:$0xff]
        %v389 = vld [vmem:[%s2 + $0x70] sm:$0xff]
        %v390 = vld [vmem:[%s2 + $0x78] sm:$0xff]
        %s391 = scalar_lea.vmem %s2, 384
        %v392 = vld [vmem:[%s391] sm:$0xff]
        %v393 = vld [vmem:[%s391 + $0x8] sm:$0xff]
        %v394 = vld [vmem:[%s391 + $0x10] sm:$0xff]
        %v395 = vld [vmem:[%s391 + $0x18] sm:$0xff]
        %v396 = vld [vmem:[%s391 + $0x20] sm:$0xff]
        %v397 = vld [vmem:[%s391 + $0x28] sm:$0xff]
        %v398 = vld [vmem:[%s391 + $0x30] sm:$0xff]
        %v399 = vld [vmem:[%s391 + $0x38] sm:$0xff]
        %v400 = vld [vmem:[%s391 + $0x40] sm:$0xff]
        %v401 = vld [vmem:[%s391 + $0x48] sm:$0xff]
        %v402 = vld [vmem:[%s391 + $0x50] sm:$0xff]
        %v403 = vld [vmem:[%s391 + $0x58] sm:$0xff]
        %v404 = vld [vmem:[%s391 + $0x60] sm:$0xff]
        %v405 = vld [vmem:[%s391 + $0x68] sm:$0xff]
        %v406 = vld [vmem:[%s391 + $0x70] sm:$0xff]
        %v407 = vld [vmem:[%s391 + $0x78] sm:$0xff]
        %408 = vmatprep.subr.mxu0 0.0
        %409 = vmatpush1.msra.mxu0 %v392
        %410 = vmatprep.subr.mxu0 0.0
        %411 = vmatpush1.msra.mxu0 %v393
        %412 = vmatprep.subr.mxu0 0.0
        %413 = vmatpush1.msra.mxu0 %v394
        %414 = vmatprep.subr.mxu0 0.0
        %415 = vmatpush1.msra.mxu0 %v395
        %416 = vmatprep.subr.mxu0 0.0
        %417 = vmatpush1.msra.mxu0 %v396
        %418 = vmatprep.subr.mxu0 0.0
        %419 = vmatpush1.msra.mxu0 %v397
        %420 = vmatprep.subr.mxu0 0.0
        %421 = vmatpush1.msra.mxu0 %v398
        %422 = vmatprep.subr.mxu0 0.0
        %423 = vmatpush1.msra.mxu0 %v399
        %424 = vmatprep.subr.mxu0 0.0
        %425 = vmatpush1.msra.mxu0 %v400
        %426 = vmatprep.subr.mxu0 0.0
        %427 = vmatpush1.msra.mxu0 %v401
        %428 = vmatprep.subr.mxu0 0.0
        %429 = vmatpush1.msra.mxu0 %v402
        %430 = vmatprep.subr.mxu0 0.0
        %431 = vmatpush1.msra.mxu0 %v403
        %432 = vmatprep.subr.mxu0 0.0
        %433 = vmatpush1.msra.mxu0 %v404
        %434 = vmatprep.subr.mxu0 0.0
        %435 = vmatpush1.msra.mxu0 %v405
        %436 = vmatprep.subr.mxu0 0.0
        %437 = vmatpush1.msra.mxu0 %v406
        %438 = vmatprep.subr.mxu0 0.0
        %439 = vmatpush1.msra.mxu0 %v407
        %440 = vmatprep.subr.mxu0 0.0
        %441 = vmatpush1.msra.mxu0 0.0
        %442 = vmatprep.subr.mxu0 0.0
        %443 = vmatpush1.msra.mxu0 0.0
        %444 = vmatprep.subr.mxu0 0.0
        %445 = vmatpush1.msra.mxu0 0.0
        %446 = vmatprep.subr.mxu0 0.0
        %447 = vmatpush1.msra.mxu0 0.0
        %448 = vmatprep.subr.mxu0 0.0
        %449 = vmatpush1.msra.mxu0 0.0
        %450 = vmatprep.subr.mxu0 0.0
        %451 = vmatpush1.msra.mxu0 0.0
        %452 = vmatprep.subr.mxu0 0.0
        %453 = vmatpush1.msra.mxu0 0.0
        %454 = vmatprep.subr.mxu0 0.0
        %455 = vmatpush1.msra.mxu0 0.0
        %456 = vmatprep.subr.mxu0 0.0
        %457 = vmatpush1.msra.mxu0 0.0
        %458 = vmatprep.subr.mxu0 0.0
        %459 = vmatpush1.msra.mxu0 0.0
        %460 = vmatprep.subr.mxu0 0.0
        %461 = vmatpush1.msra.mxu0 0.0
        %462 = vmatprep.subr.mxu0 0.0
        %463 = vmatpush1.msra.mxu0 0.0
        %464 = vmatprep.subr.mxu0 0.0
        %465 = vmatpush1.msra.mxu0 0.0
        %466 = vmatprep.subr.mxu0 0.0
        %467 = vmatpush1.msra.mxu0 0.0
        %468 = vmatprep.subr.mxu0 0.0
        %469 = vmatpush1.msra.mxu0 0.0
        %470 = vmatprep.subr.mxu0 0.0
        %471 = vmatpush1.msra.mxu0 0.0
        %472 = vmatprep.mubr.f32.mxu0 0.0
        %473 = vmatmul.mubr.f32.gmra.mrb[0].mxu0 %v360
        %v474 = vpop.f32.mrb[0].mxu0
        %v475 = vadd.f32 0.0, %v474
        %v476 = vpop.f32.mrb[0].mxu0
        %477 = vmatprep.mubr.f32.mxu0 0.0
        %478 = vmatmul.mubr.f32.gmra.mrb[0].mxu0 %v361
        %v479 = vpop.f32.mrb[0].mxu0
        %v480 = vadd.f32 0.0, %v479
        %v481 = vpop.f32.mrb[0].mxu0
        %482 = vmatprep.mubr.f32.mxu0 0.0
        %483 = vmatmul.mubr.f32.gmra.mrb[0].mxu0 %v363
        %v484 = vpop.f32.mrb[0].mxu0
        %v485 = vadd.f32 0.0, %v484
        %v486 = vpop.f32.mrb[0].mxu0
        %487 = vmatprep.mubr.f32.mxu0 0.0
        %488 = vmatmul.mubr.f32.gmra.mrb[0].mxu0 %v364
        %v489 = vpop.f32.mrb[0].mxu0
        %v490 = vadd.f32 0.0, %v489
        %v491 = vpop.f32.mrb[0].mxu0
        %492 = vmatprep.mubr.f32.mxu0 0.0
        %493 = vmatmul.mubr.f32.gmra.mrb[0].mxu0 %v366
        %v494 = vpop.f32.mrb[0].mxu0
        %v495 = vadd.f32 0.0, %v494
        %v496 = vpop.f32.mrb[0].mxu0
        %497 = vmatprep.mubr.f32.mxu0 0.0
        %498 = vmatmul.mubr.f32.gmra.mrb[0].mxu0 %v367
        %v499 = vpop.f32.mrb[0].mxu0
        %v500 = vadd.f32 0.0, %v499
        %v501 = vpop.f32.mrb[0].mxu0
        %502 = vmatprep.mubr.f32.mxu0 0.0
        %503 = vmatmul.mubr.f32.gmra.mrb[0].mxu0 %v369
        %v504 = vpop.f32.mrb[0].mxu0
        %v505 = vadd.f32 0.0, %v504
        %v506 = vpop.f32.mrb[0].mxu0
        %507 = vmatprep.mubr.f32.mxu0 0.0
        %508 = vmatmul.mubr.f32.gmra.mrb[0].mxu0 %v370
        %v509 = vpop.f32.mrb[0].mxu0
        %v510 = vadd.f32 0.0, %v509
        %v511 = vpop.f32.mrb[0].mxu0
        %512 = vdwg.mxu0
        %513 = vmatprep.subr.mxu0 0.0
        %514 = vmatpush1.msra.mxu0 %v375
        %515 = vmatprep.subr.mxu0 0.0
        %516 = vmatpush1.msra.mxu0 %v376
        %517 = vmatprep.subr.mxu0 0.0
        %518 = vmatpush1.msra.mxu0 %v377
        %519 = vmatprep.subr.mxu0 0.0
        %520 = vmatpush1.msra.mxu0 %v378
        %521 = vmatprep.subr.mxu0 0.0
        %522 = vmatpush1.msra.mxu0 %v379
        %523 = vmatprep.subr.mxu0 0.0
        %524 = vmatpush1.msra.mxu0 %v380
        %525 = vmatprep.subr.mxu0 0.0
        %526 = vmatpush1.msra.mxu0 %v381
        %527 = vmatprep.subr.mxu0 0.0
        %528 = vmatpush1.msra.mxu0 %v382
        %529 = vmatprep.subr.mxu0 0.0
        %530 = vmatpush1.msra.mxu0 %v383
        %531 = vmatprep.subr.mxu0 0.0
        %532 = vmatpush1.msra.mxu0 %v384
        %533 = vmatprep.subr.mxu0 0.0
        %534 = vmatpush1.msra.mxu0 %v385
        %535 = vmatprep.subr.mxu0 0.0
        %536 = vmatpush1.msra.mxu0 %v386
        %537 = vmatprep.subr.mxu0 0.0
        %538 = vmatpush1.msra.mxu0 %v387
        %539 = vmatprep.subr.mxu0 0.0
        %540 = vmatpush1.msra.mxu0 %v388
        %541 = vmatprep.subr.mxu0 0.0
        %542 = vmatpush1.msra.mxu0 %v389
        %543 = vmatprep.subr.mxu0 0.0
        %544 = vmatpush1.msra.mxu0 %v390
        %545 = vmatprep.subr.mxu0 0.0
        %546 = vmatpush1.msra.mxu0 0.0
        %547 = vmatprep.subr.mxu0 0.0
        %548 = vmatpush1.msra.mxu0 0.0
        %549 = vmatprep.subr.mxu0 0.0
        %550 = vmatpush1.msra.mxu0 0.0
        %551 = vmatprep.subr.mxu0 0.0
        %552 = vmatpush1.msra.mxu0 0.0
        %553 = vmatprep.subr.mxu0 0.0
        %554 = vmatpush1.msra.mxu0 0.0
        %555 = vmatprep.subr.mxu0 0.0
        %556 = vmatpush1.msra.mxu0 0.0
        %557 = vmatprep.subr.mxu0 0.0
        %558 = vmatpush1.msra.mxu0 0.0
        %559 = vmatprep.subr.mxu0 0.0
        %560 = vmatpush1.msra.mxu0 0.0
        %561 = vmatprep.subr.mxu0 0.0
        %562 = vmatpush1.msra.mxu0 0.0
        %563 = vmatprep.subr.mxu0 0.0
        %564 = vmatpush1.msra.mxu0 0.0
        %565 = vmatprep.subr.mxu0 0.0
        %566 = vmatpush1.msra.mxu0 0.0
        %567 = vmatprep.subr.mxu0 0.0
        %568 = vmatpush1.msra.mxu0 0.0
        %569 = vmatprep.subr.mxu0 0.0
        %570 = vmatpush1.msra.mxu0 0.0
        %571 = vmatprep.subr.mxu0 0.0
        %572 = vmatpush1.msra.mxu0 0.0
        %573 = vmatprep.subr.mxu0 0.0
        %574 = vmatpush1.msra.mxu0 0.0
        %575 = vmatprep.subr.mxu0 0.0
        %576 = vmatpush1.msra.mxu0 0.0
        %577 = vmatprep.mubr.f32.mxu0 0.0
        %578 = vmatmul.mubr.f32.gmra.mrb[0].mxu0 %v357
        %v579 = vpop.f32.mrb[0].mxu0
        %v580 = vadd.f32 %v475, %v579
        %v581 = vpop.f32.mrb[0].mxu0
        %582 = vmatprep.mubr.f32.mxu0 0.0
        %583 = vmatmul.mubr.f32.gmra.mrb[0].mxu0 %v358
        %v584 = vpop.f32.mrb[0].mxu0
        %v585 = vadd.f32 %v480, %v584
        %v586 = vpop.f32.mrb[0].mxu0
        %587 = vmatprep.mubr.f32.mxu0 0.0
        %588 = vmatmul.mubr.f32.gmra.mrb[0].mxu0 %v360
        %v589 = vpop.f32.mrb[0].mxu0
        %v590 = vadd.f32 %v485, %v589
        %v591 = vpop.f32.mrb[0].mxu0
        %592 = vmatprep.mubr.f32.mxu0 0.0
        %593 = vmatmul.mubr.f32.gmra.mrb[0].mxu0 %v361
        %v594 = vpop.f32.mrb[0].mxu0
        %v595 = vadd.f32 %v490, %v594
        %v596 = vpop.f32.mrb[0].mxu0
        %597 = vmatprep.mubr.f32.mxu0 0.0
        %598 = vmatmul.mubr.f32.gmra.mrb[0].mxu0 %v363
        %v599 = vpop.f32.mrb[0].mxu0
        %v600 = vadd.f32 %v495, %v599
        %v601 = vpop.f32.mrb[0].mxu0
        %602 = vmatprep.mubr.f32.mxu0 0.0
        %603 = vmatmul.mubr.f32.gmra.mrb[0].mxu0 %v364
        %v604 = vpop.f32.mrb[0].mxu0
        %v605 = vadd.f32 %v500, %v604
        %v606 = vpop.f32.mrb[0].mxu0
        %607 = vmatprep.mubr.f32.mxu0 0.0
        %608 = vmatmul.mubr.f32.gmra.mrb[0].mxu0 %v366
        %v609 = vpop.f32.mrb[0].mxu0
        %v610 = vadd.f32 %v505, %v609
        %v611 = vpop.f32.mrb[0].mxu0
        %612 = vmatprep.mubr.f32.mxu0 0.0
        %613 = vmatmul.mubr.f32.gmra.mrb[0].mxu0 %v367
        %v614 = vpop.f32.mrb[0].mxu0
        %v615 = vadd.f32 %v510, %v614
        %v616 = vpop.f32.mrb[0].mxu0
        %617 = vdwg.mxu0
        %s618 = scalar_lea.vmem %s2, 768
        %v619 = vld [vmem:[%s618] sm:$0xff]
        %v620 = vld [vmem:[%s618 + $0x8] sm:$0xff]
        %v621 = vld [vmem:[%s618 + $0x10] sm:$0xff]
        %v622 = vld [vmem:[%s618 + $0x18] sm:$0xff]
        %v623 = vld [vmem:[%s618 + $0x20] sm:$0xff]
        %v624 = vld [vmem:[%s618 + $0x28] sm:$0xff]
        %v625 = vld [vmem:[%s618 + $0x30] sm:$0xff]
        %v626 = vld [vmem:[%s618 + $0x38] sm:$0xff]
        %v627 = vld [vmem:[%s618 + $0x40] sm:$0xff]
        %v628 = vld [vmem:[%s618 + $0x48] sm:$0xff]
        %v629 = vld [vmem:[%s618 + $0x50] sm:$0xff]
        %v630 = vld [vmem:[%s618 + $0x58] sm:$0xff]
        %v631 = vld [vmem:[%s618 + $0x60] sm:$0xff]
        %v632 = vld [vmem:[%s618 + $0x68] sm:$0xff]
        %v633 = vld [vmem:[%s618 + $0x70] sm:$0xff]
        %v634 = vld [vmem:[%s618 + $0x78] sm:$0xff]
        %635 = vmatprep.subr.mxu0 0.0
        %636 = vmatpush1.msra.mxu0 %v619
        %637 = vmatprep.subr.mxu0 0.0
        %638 = vmatpush1.msra.mxu0 %v620
        %639 = vmatprep.subr.mxu0 0.0
        %640 = vmatpush1.msra.mxu0 %v621
        %641 = vmatprep.subr.mxu0 0.0
        %642 = vmatpush1.msra.mxu0 %v622
        %643 = vmatprep.subr.mxu0 0.0
        %644 = vmatpush1.msra.mxu0 %v623
        %645 = vmatprep.subr.mxu0 0.0
        %646 = vmatpush1.msra.mxu0 %v624
        %647 = vmatprep.subr.mxu0 0.0
        %648 = vmatpush1.msra.mxu0 %v625
        %649 = vmatprep.subr.mxu0 0.0
        %650 = vmatpush1.msra.mxu0 %v626
        %651 = vmatprep.subr.mxu0 0.0
        %652 = vmatpush1.msra.mxu0 %v627
        %653 = vmatprep.subr.mxu0 0.0
        %654 = vmatpush1.msra.mxu0 %v628
        %655 = vmatprep.subr.mxu0 0.0
        %656 = vmatpush1.msra.mxu0 %v629
        %657 = vmatprep.subr.mxu0 0.0
        %658 = vmatpush1.msra.mxu0 %v630
        %659 = vmatprep.subr.mxu0 0.0
        %660 = vmatpush1.msra.mxu0 %v631
        %661 = vmatprep.subr.mxu0 0.0
        %662 = vmatpush1.msra.mxu0 %v632
        %663 = vmatprep.subr.mxu0 0.0
        %664 = vmatpush1.msra.mxu0 %v633
        %665 = vmatprep.subr.mxu0 0.0
        %666 = vmatpush1.msra.mxu0 %v634
        %667 = vmatprep.subr.mxu0 0.0
        %668 = vmatpush1.msra.mxu0 0.0
        %669 = vmatprep.subr.mxu0 0.0
        %670 = vmatpush1.msra.mxu0 0.0
        %671 = vmatprep.subr.mxu0 0.0
        %672 = vmatpush1.msra.mxu0 0.0
        %673 = vmatprep.subr.mxu0 0.0
        %674 = vmatpush1.msra.mxu0 0.0
        %675 = vmatprep.subr.mxu0 0.0
        %676 = vmatpush1.msra.mxu0 0.0
        %677 = vmatprep.subr.mxu0 0.0
        %678 = vmatpush1.msra.mxu0 0.0
        %679 = vmatprep.subr.mxu0 0.0
        %680 = vmatpush1.msra.mxu0 0.0
        %681 = vmatprep.subr.mxu0 0.0
        %682 = vmatpush1.msra.mxu0 0.0
        %683 = vmatprep.subr.mxu0 0.0
        %684 = vmatpush1.msra.mxu0 0.0
        %685 = vmatprep.subr.mxu0 0.0
        %686 = vmatpush1.msra.mxu0 0.0
        %687 = vmatprep.subr.mxu0 0.0
        %688 = vmatpush1.msra.mxu0 0.0
        %689 = vmatprep.subr.mxu0 0.0
        %690 = vmatpush1.msra.mxu0 0.0
        %691 = vmatprep.subr.mxu0 0.0
        %692 = vmatpush1.msra.mxu0 0.0
        %693 = vmatprep.subr.mxu0 0.0
        %694 = vmatpush1.msra.mxu0 0.0
        %695 = vmatprep.subr.mxu0 0.0
        %696 = vmatpush1.msra.mxu0 0.0
        %697 = vmatprep.subr.mxu0 0.0
        %698 = vmatpush1.msra.mxu0 0.0
        %699 = vmatprep.mubr.f32.mxu0 0.0
        %700 = vmatmul.mubr.f32.gmra.mrb[0].mxu0 %v363
        %v701 = vpop.f32.mrb[0].mxu0
        %v702 = vadd.f32 0.0, %v701
        %v703 = vpop.f32.mrb[0].mxu0
        %704 = vmatprep.mubr.f32.mxu0 0.0
        %705 = vmatmul.mubr.f32.gmra.mrb[0].mxu0 %v364
        %v706 = vpop.f32.mrb[0].mxu0
        %v707 = vadd.f32 0.0, %v706
        %v708 = vpop.f32.mrb[0].mxu0
        %709 = vmatprep.mubr.f32.mxu0 0.0
        %710 = vmatmul.mubr.f32.gmra.mrb[0].mxu0 %v366
        %v711 = vpop.f32.mrb[0].mxu0
        %v712 = vadd.f32 0.0, %v711
        %v713 = vpop.f32.mrb[0].mxu0
        %714 = vmatprep.mubr.f32.mxu0 0.0
        %715 = vmatmul.mubr.f32.gmra.mrb[0].mxu0 %v367
        %v716 = vpop.f32.mrb[0].mxu0
        %v717 = vadd.f32 0.0, %v716
        %v718 = vpop.f32.mrb[0].mxu0
        %719 = vmatprep.mubr.f32.mxu0 0.0
        %720 = vmatmul.mubr.f32.gmra.mrb[0].mxu0 %v369
        %v721 = vpop.f32.mrb[0].mxu0
        %v722 = vadd.f32 0.0, %v721
        %v723 = vpop.f32.mrb[0].mxu0
        %724 = vmatprep.mubr.f32.mxu0 0.0
        %725 = vmatmul.mubr.f32.gmra.mrb[0].mxu0 %v370
        %v726 = vpop.f32.mrb[0].mxu0
        %v727 = vadd.f32 0.0, %v726
        %v728 = vpop.f32.mrb[0].mxu0
        %729 = vmatprep.mubr.f32.mxu0 0.0
        %730 = vmatmul.mubr.f32.gmra.mrb[0].mxu0 %v372
        %v731 = vpop.f32.mrb[0].mxu0
        %v732 = vadd.f32 0.0, %v731
        %v733 = vpop.f32.mrb[0].mxu0
        %734 = vmatprep.mubr.f32.mxu0 0.0
        %735 = vmatmul.mubr.f32.gmra.mrb[0].mxu0 %v373
        %v736 = vpop.f32.mrb[0].mxu0
        %v737 = vadd.f32 0.0, %v736
        %v738 = vpop.f32.mrb[0].mxu0
        %739 = vdwg.mxu0
        %v740 = vadd.f32 %v580, %v702
        %v741 = vadd.f32 %v585, %v707
        %v742 = vadd.f32 %v590, %v712
        %v743 = vadd.f32 %v595, %v717
        %v744 = vadd.f32 %v600, %v722
        %v745 = vadd.f32 %v605, %v727
        %v746 = vadd.f32 %v610, %v732
        %v747 = vadd.f32 %v615, %v737
        %vm766 = vcmask 1046528
        %v767 = vrot.slane %v357, 1
        %v768 = vrot.slane %v358, 1
        %v769 = vsel %vm766, %v767, %v768
        %v770 = vrot.slane %v359, 1
        %v771 = vsel %vm766, %v768, %v770
        %v772 = vrot.slane %v360, 1
        %v773 = vrot.slane %v361, 1
        %v774 = vsel %vm766, %v772, %v773
        %v775 = vrot.slane %v362, 1
        %v776 = vsel %vm766, %v773, %v775
        %v777 = vrot.slane %v363, 1
        %v778 = vrot.slane %v364, 1
        %v779 = vsel %vm766, %v777, %v778
        %v780 = vrot.slane %v365, 1
        %v781 = vsel %vm766, %v778, %v780
        %v782 = vrot.slane %v366, 1
        %v783 = vrot.slane %v367, 1
        %v784 = vsel %vm766, %v782, %v783
        %v785 = vrot.slane %v368, 1
        %v786 = vsel %vm766, %v783, %v785
        %v787 = vrot.slane %v369, 1
        %v788 = vrot.slane %v370, 1
        %v789 = vsel %vm766, %v787, %v788
        %v790 = vrot.slane %v371, 1
        %v791 = vsel %vm766, %v788, %v790
        %v792 = vrot.slane %v372, 1
        %v793 = vrot.slane %v373, 1
        %v794 = vsel %vm766, %v792, %v793
        %v795 = vrot.slane %v374, 1
        %v796 = vsel %vm766, %v793, %v795
        %s809 = scalar_lea.vmem %s2, 128
        %v810 = vld [vmem:[%s809] sm:$0xff]
        %v811 = vld [vmem:[%s809 + $0x8] sm:$0xff]
        %v812 = vld [vmem:[%s809 + $0x10] sm:$0xff]
        %v813 = vld [vmem:[%s809 + $0x18] sm:$0xff]
        %v814 = vld [vmem:[%s809 + $0x20] sm:$0xff]
        %v815 = vld [vmem:[%s809 + $0x28] sm:$0xff]
        %v816 = vld [vmem:[%s809 + $0x30] sm:$0xff]
        %v817 = vld [vmem:[%s809 + $0x38] sm:$0xff]
        %v818 = vld [vmem:[%s809 + $0x40] sm:$0xff]
        %v819 = vld [vmem:[%s809 + $0x48] sm:$0xff]
        %v820 = vld [vmem:[%s809 + $0x50] sm:$0xff]
        %v821 = vld [vmem:[%s809 + $0x58] sm:$0xff]
        %v822 = vld [vmem:[%s809 + $0x60] sm:$0xff]
        %v823 = vld [vmem:[%s809 + $0x68] sm:$0xff]
        %v824 = vld [vmem:[%s809 + $0x70] sm:$0xff]
        %v825 = vld [vmem:[%s809 + $0x78] sm:$0xff]
        %826 = vmatprep.subr.mxu0 0.0
        %827 = vmatpush1.msra.mxu0 %v810
        %828 = vmatprep.subr.mxu0 0.0
        %829 = vmatpush1.msra.mxu0 %v811
        %830 = vmatprep.subr.mxu0 0.0
        %831 = vmatpush1.msra.mxu0 %v812
        %832 = vmatprep.subr.mxu0 0.0
        %833 = vmatpush1.msra.mxu0 %v813
        %834 = vmatprep.subr.mxu0 0.0
        %835 = vmatpush1.msra.mxu0 %v814
        %836 = vmatprep.subr.mxu0 0.0
        %837 = vmatpush1.msra.mxu0 %v815
        %838 = vmatprep.subr.mxu0 0.0
        %839 = vmatpush1.msra.mxu0 %v816
        %840 = vmatprep.subr.mxu0 0.0
        %841 = vmatpush1.msra.mxu0 %v817
        %842 = vmatprep.subr.mxu0 0.0
        %843 = vmatpush1.msra.mxu0 %v818
        %844 = vmatprep.subr.mxu0 0.0
        %845 = vmatpush1.msra.mxu0 %v819
        %846 = vmatprep.subr.mxu0 0.0
        %847 = vmatpush1.msra.mxu0 %v820
        %848 = vmatprep.subr.mxu0 0.0
        %849 = vmatpush1.msra.mxu0 %v821
        %850 = vmatprep.subr.mxu0 0.0
        %851 = vmatpush1.msra.mxu0 %v822
        %852 = vmatprep.subr.mxu0 0.0
        %853 = vmatpush1.msra.mxu0 %v823
        %854 = vmatprep.subr.mxu0 0.0
        %855 = vmatpush1.msra.mxu0 %v824
        %856 = vmatprep.subr.mxu0 0.0
        %857 = vmatpush1.msra.mxu0 %v825
        %858 = vmatprep.subr.mxu0 0.0
        %859 = vmatpush1.msra.mxu0 0.0
        %860 = vmatprep.subr.mxu0 0.0
        %861 = vmatpush1.msra.mxu0 0.0
        %862 = vmatprep.subr.mxu0 0.0
        %863 = vmatpush1.msra.mxu0 0.0
        %864 = vmatprep.subr.mxu0 0.0
        %865 = vmatpush1.msra.mxu0 0.0
        %866 = vmatprep.subr.mxu0 0.0
        %867 = vmatpush1.msra.mxu0 0.0
        %868 = vmatprep.subr.mxu0 0.0
        %869 = vmatpush1.msra.mxu0 0.0
        %870 = vmatprep.subr.mxu0 0.0
        %871 = vmatpush1.msra.mxu0 0.0
        %872 = vmatprep.subr.mxu0 0.0
        %873 = vmatpush1.msra.mxu0 0.0
        %874 = vmatprep.subr.mxu0 0.0
        %875 = vmatpush1.msra.mxu0 0.0
        %876 = vmatprep.subr.mxu0 0.0
        %877 = vmatpush1.msra.mxu0 0.0
        %878 = vmatprep.subr.mxu0 0.0
        %879 = vmatpush1.msra.mxu0 0.0
        %880 = vmatprep.subr.mxu0 0.0
        %881 = vmatpush1.msra.mxu0 0.0
        %882 = vmatprep.subr.mxu0 0.0
        %883 = vmatpush1.msra.mxu0 0.0
        %884 = vmatprep.subr.mxu0 0.0
        %885 = vmatpush1.msra.mxu0 0.0
        %886 = vmatprep.subr.mxu0 0.0
        %887 = vmatpush1.msra.mxu0 0.0
        %888 = vmatprep.subr.mxu0 0.0
        %889 = vmatpush1.msra.mxu0 0.0
        %890 = vmatprep.mubr.f32.mxu0 0.0
        %891 = vmatmul.mubr.f32.gmra.mrb[0].mxu0 %v769
        %v892 = vpop.f32.mrb[0].mxu0
        %v893 = vadd.f32 0.0, %v892
        %v894 = vpop.f32.mrb[0].mxu0
        %895 = vmatprep.mubr.f32.mxu0 0.0
        %896 = vmatmul.mubr.f32.gmra.mrb[0].mxu0 %v771
        %v897 = vpop.f32.mrb[0].mxu0
        %v898 = vadd.f32 0.0, %v897
        %v899 = vpop.f32.mrb[0].mxu0
        %900 = vmatprep.mubr.f32.mxu0 0.0
        %901 = vmatmul.mubr.f32.gmra.mrb[0].mxu0 %v774
        %v902 = vpop.f32.mrb[0].mxu0
        %v903 = vadd.f32 0.0, %v902
        %v904 = vpop.f32.mrb[0].mxu0
        %905 = vmatprep.mubr.f32.mxu0 0.0
        %906 = vmatmul.mubr.f32.gmra.mrb[0].mxu0 %v776
        %v907 = vpop.f32.mrb[0].mxu0
        %v908 = vadd.f32 0.0, %v907
        %v909 = vpop.f32.mrb[0].mxu0
        %910 = vmatprep.mubr.f32.mxu0 0.0
        %911 = vmatmul.mubr.f32.gmra.mrb[0].mxu0 %v779
        %v912 = vpop.f32.mrb[0].mxu0
        %v913 = vadd.f32 0.0, %v912
        %v914 = vpop.f32.mrb[0].mxu0
        %915 = vmatprep.mubr.f32.mxu0 0.0
        %916 = vmatmul.mubr.f32.gmra.mrb[0].mxu0 %v781
        %v917 = vpop.f32.mrb[0].mxu0
        %v918 = vadd.f32 0.0, %v917
        %v919 = vpop.f32.mrb[0].mxu0
        %920 = vmatprep.mubr.f32.mxu0 0.0
        %921 = vmatmul.mubr.f32.gmra.mrb[0].mxu0 %v784
        %v922 = vpop.f32.mrb[0].mxu0
        %v923 = vadd.f32 0.0, %v922
        %v924 = vpop.f32.mrb[0].mxu0
        %925 = vmatprep.mubr.f32.mxu0 0.0
        %926 = vmatmul.mubr.f32.gmra.mrb[0].mxu0 %v786
        %v927 = vpop.f32.mrb[0].mxu0
        %v928 = vadd.f32 0.0, %v927
        %v929 = vpop.f32.mrb[0].mxu0
        %930 = vdwg.mxu0
        %v931 = vadd.f32 %v740, %v893
        %v932 = vadd.f32 %v741, %v898
        %v933 = vadd.f32 %v742, %v903
        %v934 = vadd.f32 %v743, %v908
        %v935 = vadd.f32 %v744, %v913
        %v936 = vadd.f32 %v745, %v918
        %v937 = vadd.f32 %v746, %v923
        %v938 = vadd.f32 %v747, %v928
        %s939 = scalar_lea.vmem %s2, 512
        %v940 = vld [vmem:[%s939] sm:$0xff]
        %v941 = vld [vmem:[%s939 + $0x8] sm:$0xff]
        %v942 = vld [vmem:[%s939 + $0x10] sm:$0xff]
        %v943 = vld [vmem:[%s939 + $0x18] sm:$0xff]
        %v944 = vld [vmem:[%s939 + $0x20] sm:$0xff]
        %v945 = vld [vmem:[%s939 + $0x28] sm:$0xff]
        %v946 = vld [vmem:[%s939 + $0x30] sm:$0xff]
        %v947 = vld [vmem:[%s939 + $0x38] sm:$0xff]
        %v948 = vld [vmem:[%s939 + $0x40] sm:$0xff]
        %v949 = vld [vmem:[%s939 + $0x48] sm:$0xff]
        %v950 = vld [vmem:[%s939 + $0x50] sm:$0xff]
        %v951 = vld [vmem:[%s939 + $0x58] sm:$0xff]
        %v952 = vld [vmem:[%s939 + $0x60] sm:$0xff]
        %v953 = vld [vmem:[%s939 + $0x68] sm:$0xff]
        %v954 = vld [vmem:[%s939 + $0x70] sm:$0xff]
        %v955 = vld [vmem:[%s939 + $0x78] sm:$0xff]
        %956 = vmatprep.subr.mxu0 0.0
        %957 = vmatpush1.msra.mxu0 %v940
        %958 = vmatprep.subr.mxu0 0.0
        %959 = vmatpush1.msra.mxu0 %v941
        %960 = vmatprep.subr.mxu0 0.0
        %961 = vmatpush1.msra.mxu0 %v942
        %962 = vmatprep.subr.mxu0 0.0
        %963 = vmatpush1.msra.mxu0 %v943
        %964 = vmatprep.subr.mxu0 0.0
        %965 = vmatpush1.msra.mxu0 %v944
        %966 = vmatprep.subr.mxu0 0.0
        %967 = vmatpush1.msra.mxu0 %v945
        %968 = vmatprep.subr.mxu0 0.0
        %969 = vmatpush1.msra.mxu0 %v946
        %970 = vmatprep.subr.mxu0 0.0
        %971 = vmatpush1.msra.mxu0 %v947
        %972 = vmatprep.subr.mxu0 0.0
        %973 = vmatpush1.msra.mxu0 %v948
        %974 = vmatprep.subr.mxu0 0.0
        %975 = vmatpush1.msra.mxu0 %v949
        %976 = vmatprep.subr.mxu0 0.0
        %977 = vmatpush1.msra.mxu0 %v950
        %978 = vmatprep.subr.mxu0 0.0
        %979 = vmatpush1.msra.mxu0 %v951
        %980 = vmatprep.subr.mxu0 0.0
        %981 = vmatpush1.msra.mxu0 %v952
        %982 = vmatprep.subr.mxu0 0.0
        %983 = vmatpush1.msra.mxu0 %v953
        %984 = vmatprep.subr.mxu0 0.0
        %985 = vmatpush1.msra.mxu0 %v954
        %986 = vmatprep.subr.mxu0 0.0
        %987 = vmatpush1.msra.mxu0 %v955
        %988 = vmatprep.subr.mxu0 0.0
        %989 = vmatpush1.msra.mxu0 0.0
        %990 = vmatprep.subr.mxu0 0.0
        %991 = vmatpush1.msra.mxu0 0.0
        %992 = vmatprep.subr.mxu0 0.0
        %993 = vmatpush1.msra.mxu0 0.0
        %994 = vmatprep.subr.mxu0 0.0
        %995 = vmatpush1.msra.mxu0 0.0
        %996 = vmatprep.subr.mxu0 0.0
        %997 = vmatpush1.msra.mxu0 0.0
        %998 = vmatprep.subr.mxu0 0.0
        %999 = vmatpush1.msra.mxu0 0.0
        %1000 = vmatprep.subr.mxu0 0.0
        %1001 = vmatpush1.msra.mxu0 0.0
        %1002 = vmatprep.subr.mxu0 0.0
        %1003 = vmatpush1.msra.mxu0 0.0
        %1004 = vmatprep.subr.mxu0 0.0
        %1005 = vmatpush1.msra.mxu0 0.0
        %1006 = vmatprep.subr.mxu0 0.0
        %1007 = vmatpush1.msra.mxu0 0.0
        %1008 = vmatprep.subr.mxu0 0.0
        %1009 = vmatpush1.msra.mxu0 0.0
        %1010 = vmatprep.subr.mxu0 0.0
        %1011 = vmatpush1.msra.mxu0 0.0
        %1012 = vmatprep.subr.mxu0 0.0
        %1013 = vmatpush1.msra.mxu0 0.0
        %1014 = vmatprep.subr.mxu0 0.0
        %1015 = vmatpush1.msra.mxu0 0.0
        %1016 = vmatprep.subr.mxu0 0.0
        %1017 = vmatpush1.msra.mxu0 0.0
        %1018 = vmatprep.subr.mxu0 0.0
        %1019 = vmatpush1.msra.mxu0 0.0
        %1020 = vmatprep.mubr.f32.mxu0 0.0
        %1021 = vmatmul.mubr.f32.gmra.mrb[0].mxu0 %v774
        %v1022 = vpop.f32.mrb[0].mxu0
        %v1023 = vadd.f32 0.0, %v1022
        %v1024 = vpop.f32.mrb[0].mxu0
        %1025 = vmatprep.mubr.f32.mxu0 0.0
        %1026 = vmatmul.mubr.f32.gmra.mrb[0].mxu0 %v776
        %v1027 = vpop.f32.mrb[0].mxu0
        %v1028 = vadd.f32 0.0, %v1027
        %v1029 = vpop.f32.mrb[0].mxu0
        %1030 = vmatprep.mubr.f32.mxu0 0.0
        %1031 = vmatmul.mubr.f32.gmra.mrb[0].mxu0 %v779
        %v1032 = vpop.f32.mrb[0].mxu0
        %v1033 = vadd.f32 0.0, %v1032
        %v1034 = vpop.f32.mrb[0].mxu0
        %1035 = vmatprep.mubr.f32.mxu0 0.0
        %1036 = vmatmul.mubr.f32.gmra.mrb[0].mxu0 %v781
        %v1037 = vpop.f32.mrb[0].mxu0
        %v1038 = vadd.f32 0.0, %v1037
        %v1039 = vpop.f32.mrb[0].mxu0
        %1040 = vmatprep.mubr.f32.mxu0 0.0
        %1041 = vmatmul.mubr.f32.gmra.mrb[0].mxu0 %v784
        %v1042 = vpop.f32.mrb[0].mxu0
        %v1043 = vadd.f32 0.0, %v1042
        %v1044 = vpop.f32.mrb[0].mxu0
        %1045 = vmatprep.mubr.f32.mxu0 0.0
        %1046 = vmatmul.mubr.f32.gmra.mrb[0].mxu0 %v786
        %v1047 = vpop.f32.mrb[0].mxu0
        %v1048 = vadd.f32 0.0, %v1047
        %v1049 = vpop.f32.mrb[0].mxu0
        %1050 = vmatprep.mubr.f32.mxu0 0.0
        %1051 = vmatmul.mubr.f32.gmra.mrb[0].mxu0 %v789
        %v1052 = vpop.f32.mrb[0].mxu0
        %v1053 = vadd.f32 0.0, %v1052
        %v1054 = vpop.f32.mrb[0].mxu0
        %1055 = vmatprep.mubr.f32.mxu0 0.0
        %1056 = vmatmul.mubr.f32.gmra.mrb[0].mxu0 %v791
        %v1057 = vpop.f32.mrb[0].mxu0
        %v1058 = vadd.f32 0.0, %v1057
        %v1059 = vpop.f32.mrb[0].mxu0
        %1060 = vdwg.mxu0
        %v1061 = vadd.f32 %v931, %v1023
        %v1062 = vadd.f32 %v932, %v1028
        %v1063 = vadd.f32 %v933, %v1033
        %v1064 = vadd.f32 %v934, %v1038
        %v1065 = vadd.f32 %v935, %v1043
        %v1066 = vadd.f32 %v936, %v1048
        %v1067 = vadd.f32 %v937, %v1053
        %v1068 = vadd.f32 %v938, %v1058
        %s1069 = scalar_lea.vmem %s2, 896
        %v1070 = vld [vmem:[%s1069] sm:$0xff]
        %v1071 = vld [vmem:[%s1069 + $0x8] sm:$0xff]
        %v1072 = vld [vmem:[%s1069 + $0x10] sm:$0xff]
        %v1073 = vld [vmem:[%s1069 + $0x18] sm:$0xff]
        %v1074 = vld [vmem:[%s1069 + $0x20] sm:$0xff]
        %v1075 = vld [vmem:[%s1069 + $0x28] sm:$0xff]
        %v1076 = vld [vmem:[%s1069 + $0x30] sm:$0xff]
        %v1077 = vld [vmem:[%s1069 + $0x38] sm:$0xff]
        %v1078 = vld [vmem:[%s1069 + $0x40] sm:$0xff]
        %v1079 = vld [vmem:[%s1069 + $0x48] sm:$0xff]
        %v1080 = vld [vmem:[%s1069 + $0x50] sm:$0xff]
        %v1081 = vld [vmem:[%s1069 + $0x58] sm:$0xff]
        %v1082 = vld [vmem:[%s1069 + $0x60] sm:$0xff]
        %v1083 = vld [vmem:[%s1069 + $0x68] sm:$0xff]
        %v1084 = vld [vmem:[%s1069 + $0x70] sm:$0xff]
        %v1085 = vld [vmem:[%s1069 + $0x78] sm:$0xff]
        %1086 = vmatprep.subr.mxu0 0.0
        %1087 = vmatpush1.msra.mxu0 %v1070
        %1088 = vmatprep.subr.mxu0 0.0
        %1089 = vmatpush1.msra.mxu0 %v1071
        %1090 = vmatprep.subr.mxu0 0.0
        %1091 = vmatpush1.msra.mxu0 %v1072
        %1092 = vmatprep.subr.mxu0 0.0
        %1093 = vmatpush1.msra.mxu0 %v1073
        %1094 = vmatprep.subr.mxu0 0.0
        %1095 = vmatpush1.msra.mxu0 %v1074
        %1096 = vmatprep.subr.mxu0 0.0
        %1097 = vmatpush1.msra.mxu0 %v1075
        %1098 = vmatprep.subr.mxu0 0.0
        %1099 = vmatpush1.msra.mxu0 %v1076
        %1100 = vmatprep.subr.mxu0 0.0
        %1101 = vmatpush1.msra.mxu0 %v1077
        %1102 = vmatprep.subr.mxu0 0.0
        %1103 = vmatpush1.msra.mxu0 %v1078
        %1104 = vmatprep.subr.mxu0 0.0
        %1105 = vmatpush1.msra.mxu0 %v1079
        %1106 = vmatprep.subr.mxu0 0.0
        %1107 = vmatpush1.msra.mxu0 %v1080
        %1108 = vmatprep.subr.mxu0 0.0
        %1109 = vmatpush1.msra.mxu0 %v1081
        %1110 = vmatprep.subr.mxu0 0.0
        %1111 = vmatpush1.msra.mxu0 %v1082
        %1112 = vmatprep.subr.mxu0 0.0
        %1113 = vmatpush1.msra.mxu0 %v1083
        %1114 = vmatprep.subr.mxu0 0.0
        %1115 = vmatpush1.msra.mxu0 %v1084
        %1116 = vmatprep.subr.mxu0 0.0
        %1117 = vmatpush1.msra.mxu0 %v1085
        %1118 = vmatprep.subr.mxu0 0.0
        %1119 = vmatpush1.msra.mxu0 0.0
        %1120 = vmatprep.subr.mxu0 0.0
        %1121 = vmatpush1.msra.mxu0 0.0
        %1122 = vmatprep.subr.mxu0 0.0
        %1123 = vmatpush1.msra.mxu0 0.0
        %1124 = vmatprep.subr.mxu0 0.0
        %1125 = vmatpush1.msra.mxu0 0.0
        %1126 = vmatprep.subr.mxu0 0.0
        %1127 = vmatpush1.msra.mxu0 0.0
        %1128 = vmatprep.subr.mxu0 0.0
        %1129 = vmatpush1.msra.mxu0 0.0
        %1130 = vmatprep.subr.mxu0 0.0
        %1131 = vmatpush1.msra.mxu0 0.0
        %1132 = vmatprep.subr.mxu0 0.0
        %1133 = vmatpush1.msra.mxu0 0.0
        %1134 = vmatprep.subr.mxu0 0.0
        %1135 = vmatpush1.msra.mxu0 0.0
        %1136 = vmatprep.subr.mxu0 0.0
        %1137 = vmatpush1.msra.mxu0 0.0
        %1138 = vmatprep.subr.mxu0 0.0
        %1139 = vmatpush1.msra.mxu0 0.0
        %1140 = vmatprep.subr.mxu0 0.0
        %1141 = vmatpush1.msra.mxu0 0.0
        %1142 = vmatprep.subr.mxu0 0.0
        %1143 = vmatpush1.msra.mxu0 0.0
        %1144 = vmatprep.subr.mxu0 0.0
        %1145 = vmatpush1.msra.mxu0 0.0
        %1146 = vmatprep.subr.mxu0 0.0
        %1147 = vmatpush1.msra.mxu0 0.0
        %1148 = vmatprep.subr.mxu0 0.0
        %1149 = vmatpush1.msra.mxu0 0.0
        %1150 = vmatprep.mubr.f32.mxu0 0.0
        %1151 = vmatmul.mubr.f32.gmra.mrb[0].mxu0 %v779
        %v1152 = vpop.f32.mrb[0].mxu0
        %v1153 = vadd.f32 0.0, %v1152
        %v1154 = vpop.f32.mrb[0].mxu0
        %1155 = vmatprep.mubr.f32.mxu0 0.0
        %1156 = vmatmul.mubr.f32.gmra.mrb[0].mxu0 %v781
        %v1157 = vpop.f32.mrb[0].mxu0
        %v1158 = vadd.f32 0.0, %v1157
        %v1159 = vpop.f32.mrb[0].mxu0
        %1160 = vmatprep.mubr.f32.mxu0 0.0
        %1161 = vmatmul.mubr.f32.gmra.mrb[0].mxu0 %v784
        %v1162 = vpop.f32.mrb[0].mxu0
        %v1163 = vadd.f32 0.0, %v1162
        %v1164 = vpop.f32.mrb[0].mxu0
        %1165 = vmatprep.mubr.f32.mxu0 0.0
        %1166 = vmatmul.mubr.f32.gmra.mrb[0].mxu0 %v786
        %v1167 = vpop.f32.mrb[0].mxu0
        %v1168 = vadd.f32 0.0, %v1167
        %v1169 = vpop.f32.mrb[0].mxu0
        %1170 = vmatprep.mubr.f32.mxu0 0.0
        %1171 = vmatmul.mubr.f32.gmra.mrb[0].mxu0 %v789
        %v1172 = vpop.f32.mrb[0].mxu0
        %v1173 = vadd.f32 0.0, %v1172
        %v1174 = vpop.f32.mrb[0].mxu0
        %1175 = vmatprep.mubr.f32.mxu0 0.0
        %1176 = vmatmul.mubr.f32.gmra.mrb[0].mxu0 %v791
        %v1177 = vpop.f32.mrb[0].mxu0
        %v1178 = vadd.f32 0.0, %v1177
        %v1179 = vpop.f32.mrb[0].mxu0
        %1180 = vmatprep.mubr.f32.mxu0 0.0
        %1181 = vmatmul.mubr.f32.gmra.mrb[0].mxu0 %v794
        %v1182 = vpop.f32.mrb[0].mxu0
        %v1183 = vadd.f32 0.0, %v1182
        %v1184 = vpop.f32.mrb[0].mxu0
        %1185 = vmatprep.mubr.f32.mxu0 0.0
        %1186 = vmatmul.mubr.f32.gmra.mrb[0].mxu0 %v796
        %v1187 = vpop.f32.mrb[0].mxu0
        %v1188 = vadd.f32 0.0, %v1187
        %v1189 = vpop.f32.mrb[0].mxu0
        %1190 = vdwg.mxu0
        %v1191 = vadd.f32 %v1061, %v1153
        %v1192 = vadd.f32 %v1062, %v1158
        %v1193 = vadd.f32 %v1063, %v1163
        %v1194 = vadd.f32 %v1064, %v1168
        %v1195 = vadd.f32 %v1065, %v1173
        %v1196 = vadd.f32 %v1066, %v1178
        %v1197 = vadd.f32 %v1067, %v1183
        %v1198 = vadd.f32 %v1068, %v1188
        %vm1199 = vcmask 1045504
        %v1200 = vrot.slane %v357, 2
        %v1201 = vrot.slane %v358, 2
        %v1202 = vsel %vm1199, %v1200, %v1201
        %v1203 = vrot.slane %v359, 2
        %v1204 = vsel %vm1199, %v1201, %v1203
        %v1205 = vrot.slane %v360, 2
        %v1206 = vrot.slane %v361, 2
        %v1207 = vsel %vm1199, %v1205, %v1206
        %v1208 = vrot.slane %v362, 2
        %v1209 = vsel %vm1199, %v1206, %v1208
        %v1210 = vrot.slane %v363, 2
        %v1211 = vrot.slane %v364, 2
        %v1212 = vsel %vm1199, %v1210, %v1211
        %v1213 = vrot.slane %v365, 2
        %v1214 = vsel %vm1199, %v1211, %v1213
        %v1215 = vrot.slane %v366, 2
        %v1216 = vrot.slane %v367, 2
        %v1217 = vsel %vm1199, %v1215, %v1216
        %v1218 = vrot.slane %v368, 2
        %v1219 = vsel %vm1199, %v1216, %v1218
        %v1220 = vrot.slane %v369, 2
        %v1221 = vrot.slane %v370, 2
        %v1222 = vsel %vm1199, %v1220, %v1221
        %v1223 = vrot.slane %v371, 2
        %v1224 = vsel %vm1199, %v1221, %v1223
        %v1225 = vrot.slane %v372, 2
        %v1226 = vrot.slane %v373, 2
        %v1227 = vsel %vm1199, %v1225, %v1226
        %v1228 = vrot.slane %v374, 2
        %v1229 = vsel %vm1199, %v1226, %v1228
        %s1242 = scalar_lea.vmem %s2, 256
        %v1243 = vld [vmem:[%s1242] sm:$0xff]
        %v1244 = vld [vmem:[%s1242 + $0x8] sm:$0xff]
        %v1245 = vld [vmem:[%s1242 + $0x10] sm:$0xff]
        %v1246 = vld [vmem:[%s1242 + $0x18] sm:$0xff]
        %v1247 = vld [vmem:[%s1242 + $0x20] sm:$0xff]
        %v1248 = vld [vmem:[%s1242 + $0x28] sm:$0xff]
        %v1249 = vld [vmem:[%s1242 + $0x30] sm:$0xff]
        %v1250 = vld [vmem:[%s1242 + $0x38] sm:$0xff]
        %v1251 = vld [vmem:[%s1242 + $0x40] sm:$0xff]
        %v1252 = vld [vmem:[%s1242 + $0x48] sm:$0xff]
        %v1253 = vld [vmem:[%s1242 + $0x50] sm:$0xff]
        %v1254 = vld [vmem:[%s1242 + $0x58] sm:$0xff]
        %v1255 = vld [vmem:[%s1242 + $0x60] sm:$0xff]
        %v1256 = vld [vmem:[%s1242 + $0x68] sm:$0xff]
        %v1257 = vld [vmem:[%s1242 + $0x70] sm:$0xff]
        %v1258 = vld [vmem:[%s1242 + $0x78] sm:$0xff]
        %1259 = vmatprep.subr.mxu0 0.0
        %1260 = vmatpush1.msra.mxu0 %v1243
        %1261 = vmatprep.subr.mxu0 0.0
        %1262 = vmatpush1.msra.mxu0 %v1244
        %1263 = vmatprep.subr.mxu0 0.0
        %1264 = vmatpush1.msra.mxu0 %v1245
        %1265 = vmatprep.subr.mxu0 0.0
        %1266 = vmatpush1.msra.mxu0 %v1246
        %1267 = vmatprep.subr.mxu0 0.0
        %1268 = vmatpush1.msra.mxu0 %v1247
        %1269 = vmatprep.subr.mxu0 0.0
        %1270 = vmatpush1.msra.mxu0 %v1248
        %1271 = vmatprep.subr.mxu0 0.0
        %1272 = vmatpush1.msra.mxu0 %v1249
        %1273 = vmatprep.subr.mxu0 0.0
        %1274 = vmatpush1.msra.mxu0 %v1250
        %1275 = vmatprep.subr.mxu0 0.0
        %1276 = vmatpush1.msra.mxu0 %v1251
        %1277 = vmatprep.subr.mxu0 0.0
        %1278 = vmatpush1.msra.mxu0 %v1252
        %1279 = vmatprep.subr.mxu0 0.0
        %1280 = vmatpush1.msra.mxu0 %v1253
        %1281 = vmatprep.subr.mxu0 0.0
        %1282 = vmatpush1.msra.mxu0 %v1254
        %1283 = vmatprep.subr.mxu0 0.0
        %1284 = vmatpush1.msra.mxu0 %v1255
        %1285 = vmatprep.subr.mxu0 0.0
        %1286 = vmatpush1.msra.mxu0 %v1256
        %1287 = vmatprep.subr.mxu0 0.0
        %1288 = vmatpush1.msra.mxu0 %v1257
        %1289 = vmatprep.subr.mxu0 0.0
        %1290 = vmatpush1.msra.mxu0 %v1258
        %1291 = vmatprep.subr.mxu0 0.0
        %1292 = vmatpush1.msra.mxu0 0.0
        %1293 = vmatprep.subr.mxu0 0.0
        %1294 = vmatpush1.msra.mxu0 0.0
        %1295 = vmatprep.subr.mxu0 0.0
        %1296 = vmatpush1.msra.mxu0 0.0
        %1297 = vmatprep.subr.mxu0 0.0
        %1298 = vmatpush1.msra.mxu0 0.0
        %1299 = vmatprep.subr.mxu0 0.0
        %1300 = vmatpush1.msra.mxu0 0.0
        %1301 = vmatprep.subr.mxu0 0.0
        %1302 = vmatpush1.msra.mxu0 0.0
        %1303 = vmatprep.subr.mxu0 0.0
        %1304 = vmatpush1.msra.mxu0 0.0
        %1305 = vmatprep.subr.mxu0 0.0
        %1306 = vmatpush1.msra.mxu0 0.0
        %1307 = vmatprep.subr.mxu0 0.0
        %1308 = vmatpush1.msra.mxu0 0.0
        %1309 = vmatprep.subr.mxu0 0.0
        %1310 = vmatpush1.msra.mxu0 0.0
        %1311 = vmatprep.subr.mxu0 0.0
        %1312 = vmatpush1.msra.mxu0 0.0
        %1313 = vmatprep.subr.mxu0 0.0
        %1314 = vmatpush1.msra.mxu0 0.0
        %1315 = vmatprep.subr.mxu0 0.0
        %1316 = vmatpush1.msra.mxu0 0.0
        %1317 = vmatprep.subr.mxu0 0.0
        %1318 = vmatpush1.msra.mxu0 0.0
        %1319 = vmatprep.subr.mxu0 0.0
        %1320 = vmatpush1.msra.mxu0 0.0
        %1321 = vmatprep.subr.mxu0 0.0
        %1322 = vmatpush1.msra.mxu0 0.0
        %1323 = vmatprep.mubr.f32.mxu0 0.0
        %1324 = vmatmul.mubr.f32.gmra.mrb[0].mxu0 %v1202
        %v1325 = vpop.f32.mrb[0].mxu0
        %v1326 = vadd.f32 0.0, %v1325
        %v1327 = vpop.f32.mrb[0].mxu0
        %1328 = vmatprep.mubr.f32.mxu0 0.0
        %1329 = vmatmul.mubr.f32.gmra.mrb[0].mxu0 %v1204
        %v1330 = vpop.f32.mrb[0].mxu0
        %v1331 = vadd.f32 0.0, %v1330
        %v1332 = vpop.f32.mrb[0].mxu0
        %1333 = vmatprep.mubr.f32.mxu0 0.0
        %1334 = vmatmul.mubr.f32.gmra.mrb[0].mxu0 %v1207
        %v1335 = vpop.f32.mrb[0].mxu0
        %v1336 = vadd.f32 0.0, %v1335
        %v1337 = vpop.f32.mrb[0].mxu0
        %1338 = vmatprep.mubr.f32.mxu0 0.0
        %1339 = vmatmul.mubr.f32.gmra.mrb[0].mxu0 %v1209
        %v1340 = vpop.f32.mrb[0].mxu0
        %v1341 = vadd.f32 0.0, %v1340
        %v1342 = vpop.f32.mrb[0].mxu0
        %1343 = vmatprep.mubr.f32.mxu0 0.0
        %1344 = vmatmul.mubr.f32.gmra.mrb[0].mxu0 %v1212
        %v1345 = vpop.f32.mrb[0].mxu0
        %v1346 = vadd.f32 0.0, %v1345
        %v1347 = vpop.f32.mrb[0].mxu0
        %1348 = vmatprep.mubr.f32.mxu0 0.0
        %1349 = vmatmul.mubr.f32.gmra.mrb[0].mxu0 %v1214
        %v1350 = vpop.f32.mrb[0].mxu0
        %v1351 = vadd.f32 0.0, %v1350
        %v1352 = vpop.f32.mrb[0].mxu0
        %1353 = vmatprep.mubr.f32.mxu0 0.0
        %1354 = vmatmul.mubr.f32.gmra.mrb[0].mxu0 %v1217
        %v1355 = vpop.f32.mrb[0].mxu0
        %v1356 = vadd.f32 0.0, %v1355
        %v1357 = vpop.f32.mrb[0].mxu0
        %1358 = vmatprep.mubr.f32.mxu0 0.0
        %1359 = vmatmul.mubr.f32.gmra.mrb[0].mxu0 %v1219
        %v1360 = vpop.f32.mrb[0].mxu0
        %v1361 = vadd.f32 0.0, %v1360
        %v1362 = vpop.f32.mrb[0].mxu0
        %1363 = vdwg.mxu0
        %v1364 = vadd.f32 %v1191, %v1326
        %v1365 = vadd.f32 %v1192, %v1331
        %v1366 = vadd.f32 %v1193, %v1336
        %v1367 = vadd.f32 %v1194, %v1341
        %v1368 = vadd.f32 %v1195, %v1346
        %v1369 = vadd.f32 %v1196, %v1351
        %v1370 = vadd.f32 %v1197, %v1356
        %v1371 = vadd.f32 %v1198, %v1361
        %s1372 = scalar_lea.vmem %s2, 640
        %v1373 = vld [vmem:[%s1372] sm:$0xff]
        %v1374 = vld [vmem:[%s1372 + $0x8] sm:$0xff]
        %v1375 = vld [vmem:[%s1372 + $0x10] sm:$0xff]
        %v1376 = vld [vmem:[%s1372 + $0x18] sm:$0xff]
        %v1377 = vld [vmem:[%s1372 + $0x20] sm:$0xff]
        %v1378 = vld [vmem:[%s1372 + $0x28] sm:$0xff]
        %v1379 = vld [vmem:[%s1372 + $0x30] sm:$0xff]
        %v1380 = vld [vmem:[%s1372 + $0x38] sm:$0xff]
        %v1381 = vld [vmem:[%s1372 + $0x40] sm:$0xff]
        %v1382 = vld [vmem:[%s1372 + $0x48] sm:$0xff]
        %v1383 = vld [vmem:[%s1372 + $0x50] sm:$0xff]
        %v1384 = vld [vmem:[%s1372 + $0x58] sm:$0xff]
        %v1385 = vld [vmem:[%s1372 + $0x60] sm:$0xff]
        %v1386 = vld [vmem:[%s1372 + $0x68] sm:$0xff]
        %v1387 = vld [vmem:[%s1372 + $0x70] sm:$0xff]
        %v1388 = vld [vmem:[%s1372 + $0x78] sm:$0xff]
        %1389 = vmatprep.subr.mxu0 0.0
        %1390 = vmatpush1.msra.mxu0 %v1373
        %1391 = vmatprep.subr.mxu0 0.0
        %1392 = vmatpush1.msra.mxu0 %v1374
        %1393 = vmatprep.subr.mxu0 0.0
        %1394 = vmatpush1.msra.mxu0 %v1375
        %1395 = vmatprep.subr.mxu0 0.0
        %1396 = vmatpush1.msra.mxu0 %v1376
        %1397 = vmatprep.subr.mxu0 0.0
        %1398 = vmatpush1.msra.mxu0 %v1377
        %1399 = vmatprep.subr.mxu0 0.0
        %1400 = vmatpush1.msra.mxu0 %v1378
        %1401 = vmatprep.subr.mxu0 0.0
        %1402 = vmatpush1.msra.mxu0 %v1379
        %1403 = vmatprep.subr.mxu0 0.0
        %1404 = vmatpush1.msra.mxu0 %v1380
        %1405 = vmatprep.subr.mxu0 0.0
        %1406 = vmatpush1.msra.mxu0 %v1381
        %1407 = vmatprep.subr.mxu0 0.0
        %1408 = vmatpush1.msra.mxu0 %v1382
        %1409 = vmatprep.subr.mxu0 0.0
        %1410 = vmatpush1.msra.mxu0 %v1383
        %1411 = vmatprep.subr.mxu0 0.0
        %1412 = vmatpush1.msra.mxu0 %v1384
        %1413 = vmatprep.subr.mxu0 0.0
        %1414 = vmatpush1.msra.mxu0 %v1385
        %1415 = vmatprep.subr.mxu0 0.0
        %1416 = vmatpush1.msra.mxu0 %v1386
        %1417 = vmatprep.subr.mxu0 0.0
        %1418 = vmatpush1.msra.mxu0 %v1387
        %1419 = vmatprep.subr.mxu0 0.0
        %1420 = vmatpush1.msra.mxu0 %v1388
        %1421 = vmatprep.subr.mxu0 0.0
        %1422 = vmatpush1.msra.mxu0 0.0
        %1423 = vmatprep.subr.mxu0 0.0
        %1424 = vmatpush1.msra.mxu0 0.0
        %1425 = vmatprep.subr.mxu0 0.0
        %1426 = vmatpush1.msra.mxu0 0.0
        %1427 = vmatprep.subr.mxu0 0.0
        %1428 = vmatpush1.msra.mxu0 0.0
        %1429 = vmatprep.subr.mxu0 0.0
        %1430 = vmatpush1.msra.mxu0 0.0
        %1431 = vmatprep.subr.mxu0 0.0
        %1432 = vmatpush1.msra.mxu0 0.0
        %1433 = vmatprep.subr.mxu0 0.0
        %1434 = vmatpush1.msra.mxu0 0.0
        %1435 = vmatprep.subr.mxu0 0.0
        %1436 = vmatpush1.msra.mxu0 0.0
        %1437 = vmatprep.subr.mxu0 0.0
        %1438 = vmatpush1.msra.mxu0 0.0
        %1439 = vmatprep.subr.mxu0 0.0
        %1440 = vmatpush1.msra.mxu0 0.0
        %1441 = vmatprep.subr.mxu0 0.0
        %1442 = vmatpush1.msra.mxu0 0.0
        %1443 = vmatprep.subr.mxu0 0.0
        %1444 = vmatpush1.msra.mxu0 0.0
        %1445 = vmatprep.subr.mxu0 0.0
        %1446 = vmatpush1.msra.mxu0 0.0
        %1447 = vmatprep.subr.mxu0 0.0
        %1448 = vmatpush1.msra.mxu0 0.0
        %1449 = vmatprep.subr.mxu0 0.0
        %1450 = vmatpush1.msra.mxu0 0.0
        %1451 = vmatprep.subr.mxu0 0.0
        %1452 = vmatpush1.msra.mxu0 0.0
        %1453 = vmatprep.mubr.f32.mxu0 0.0
        %1454 = vmatmul.mubr.f32.gmra.mrb[0].mxu0 %v1207
        %v1455 = vpop.f32.mrb[0].mxu0
        %v1456 = vadd.f32 0.0, %v1455
        %v1457 = vpop.f32.mrb[0].mxu0
        %1458 = vmatprep.mubr.f32.mxu0 0.0
        %1459 = vmatmul.mubr.f32.gmra.mrb[0].mxu0 %v1209
        %v1460 = vpop.f32.mrb[0].mxu0
        %v1461 = vadd.f32 0.0, %v1460
        %v1462 = vpop.f32.mrb[0].mxu0
        %1463 = vmatprep.mubr.f32.mxu0 0.0
        %1464 = vmatmul.mubr.f32.gmra.mrb[0].mxu0 %v1212
        %v1465 = vpop.f32.mrb[0].mxu0
        %v1466 = vadd.f32 0.0, %v1465
        %v1467 = vpop.f32.mrb[0].mxu0
        %1468 = vmatprep.mubr.f32.mxu0 0.0
        %1469 = vmatmul.mubr.f32.gmra.mrb[0].mxu0 %v1214
        %v1470 = vpop.f32.mrb[0].mxu0
        %v1471 = vadd.f32 0.0, %v1470
        %v1472 = vpop.f32.mrb[0].mxu0
        %1473 = vmatprep.mubr.f32.mxu0 0.0
        %1474 = vmatmul.mubr.f32.gmra.mrb[0].mxu0 %v1217
        %v1475 = vpop.f32.mrb[0].mxu0
        %v1476 = vadd.f32 0.0, %v1475
        %v1477 = vpop.f32.mrb[0].mxu0
        %1478 = vmatprep.mubr.f32.mxu0 0.0
        %1479 = vmatmul.mubr.f32.gmra.mrb[0].mxu0 %v1219
        %v1480 = vpop.f32.mrb[0].mxu0
        %v1481 = vadd.f32 0.0, %v1480
        %v1482 = vpop.f32.mrb[0].mxu0
        %1483 = vmatprep.mubr.f32.mxu0 0.0
        %1484 = vmatmul.mubr.f32.gmra.mrb[0].mxu0 %v1222
        %v1485 = vpop.f32.mrb[0].mxu0
        %v1486 = vadd.f32 0.0, %v1485
        %v1487 = vpop.f32.mrb[0].mxu0
        %1488 = vmatprep.mubr.f32.mxu0 0.0
        %1489 = vmatmul.mubr.f32.gmra.mrb[0].mxu0 %v1224
        %v1490 = vpop.f32.mrb[0].mxu0
        %v1491 = vadd.f32 0.0, %v1490
        %v1492 = vpop.f32.mrb[0].mxu0
        %1493 = vdwg.mxu0
        %v1494 = vadd.f32 %v1364, %v1456
        %v1495 = vadd.f32 %v1365, %v1461
        %v1496 = vadd.f32 %v1366, %v1466
        %v1497 = vadd.f32 %v1367, %v1471
        %v1498 = vadd.f32 %v1368, %v1476
        %v1499 = vadd.f32 %v1369, %v1481
        %v1500 = vadd.f32 %v1370, %v1486
        %v1501 = vadd.f32 %v1371, %v1491
        %s1502 = scalar_lea.vmem %s2, 1024
        %v1503 = vld [vmem:[%s1502] sm:$0xff]
        %v1504 = vld [vmem:[%s1502 + $0x8] sm:$0xff]
        %v1505 = vld [vmem:[%s1502 + $0x10] sm:$0xff]
        %v1506 = vld [vmem:[%s1502 + $0x18] sm:$0xff]
        %v1507 = vld [vmem:[%s1502 + $0x20] sm:$0xff]
        %v1508 = vld [vmem:[%s1502 + $0x28] sm:$0xff]
        %v1509 = vld [vmem:[%s1502 + $0x30] sm:$0xff]
        %v1510 = vld [vmem:[%s1502 + $0x38] sm:$0xff]
        %v1511 = vld [vmem:[%s1502 + $0x40] sm:$0xff]
        %v1512 = vld [vmem:[%s1502 + $0x48] sm:$0xff]
        %v1513 = vld [vmem:[%s1502 + $0x50] sm:$0xff]
        %v1514 = vld [vmem:[%s1502 + $0x58] sm:$0xff]
        %v1515 = vld [vmem:[%s1502 + $0x60] sm:$0xff]
        %v1516 = vld [vmem:[%s1502 + $0x68] sm:$0xff]
        %v1517 = vld [vmem:[%s1502 + $0x70] sm:$0xff]
        %v1518 = vld [vmem:[%s1502 + $0x78] sm:$0xff]
        %1519 = vmatprep.subr.mxu0 0.0
        %1520 = vmatpush1.msra.mxu0 %v1503
        %1521 = vmatprep.subr.mxu0 0.0
        %1522 = vmatpush1.msra.mxu0 %v1504
        %1523 = vmatprep.subr.mxu0 0.0
        %1524 = vmatpush1.msra.mxu0 %v1505
        %1525 = vmatprep.subr.mxu0 0.0
        %1526 = vmatpush1.msra.mxu0 %v1506
        %1527 = vmatprep.subr.mxu0 0.0
        %1528 = vmatpush1.msra.mxu0 %v1507
        %1529 = vmatprep.subr.mxu0 0.0
        %1530 = vmatpush1.msra.mxu0 %v1508
        %1531 = vmatprep.subr.mxu0 0.0
        %1532 = vmatpush1.msra.mxu0 %v1509
        %1533 = vmatprep.subr.mxu0 0.0
        %1534 = vmatpush1.msra.mxu0 %v1510
        %1535 = vmatprep.subr.mxu0 0.0
        %1536 = vmatpush1.msra.mxu0 %v1511
        %1537 = vmatprep.subr.mxu0 0.0
        %1538 = vmatpush1.msra.mxu0 %v1512
        %1539 = vmatprep.subr.mxu0 0.0
        %1540 = vmatpush1.msra.mxu0 %v1513
        %1541 = vmatprep.subr.mxu0 0.0
        %1542 = vmatpush1.msra.mxu0 %v1514
        %1543 = vmatprep.subr.mxu0 0.0
        %1544 = vmatpush1.msra.mxu0 %v1515
        %1545 = vmatprep.subr.mxu0 0.0
        %1546 = vmatpush1.msra.mxu0 %v1516
        %1547 = vmatprep.subr.mxu0 0.0
        %1548 = vmatpush1.msra.mxu0 %v1517
        %1549 = vmatprep.subr.mxu0 0.0
        %1550 = vmatpush1.msra.mxu0 %v1518
        %1551 = vmatprep.subr.mxu0 0.0
        %1552 = vmatpush1.msra.mxu0 0.0
        %1553 = vmatprep.subr.mxu0 0.0
        %1554 = vmatpush1.msra.mxu0 0.0
        %1555 = vmatprep.subr.mxu0 0.0
        %1556 = vmatpush1.msra.mxu0 0.0
        %1557 = vmatprep.subr.mxu0 0.0
        %1558 = vmatpush1.msra.mxu0 0.0
        %1559 = vmatprep.subr.mxu0 0.0
        %1560 = vmatpush1.msra.mxu0 0.0
        %1561 = vmatprep.subr.mxu0 0.0
        %1562 = vmatpush1.msra.mxu0 0.0
        %1563 = vmatprep.subr.mxu0 0.0
        %1564 = vmatpush1.msra.mxu0 0.0
        %1565 = vmatprep.subr.mxu0 0.0
        %1566 = vmatpush1.msra.mxu0 0.0
        %1567 = vmatprep.subr.mxu0 0.0
        %1568 = vmatpush1.msra.mxu0 0.0
        %1569 = vmatprep.subr.mxu0 0.0
        %1570 = vmatpush1.msra.mxu0 0.0
        %1571 = vmatprep.subr.mxu0 0.0
        %1572 = vmatpush1.msra.mxu0 0.0
        %1573 = vmatprep.subr.mxu0 0.0
        %1574 = vmatpush1.msra.mxu0 0.0
        %1575 = vmatprep.subr.mxu0 0.0
        %1576 = vmatpush1.msra.mxu0 0.0
        %1577 = vmatprep.subr.mxu0 0.0
        %1578 = vmatpush1.msra.mxu0 0.0
        %1579 = vmatprep.subr.mxu0 0.0
        %1580 = vmatpush1.msra.mxu0 0.0
        %1581 = vmatprep.subr.mxu0 0.0
        %1582 = vmatpush1.msra.mxu0 0.0
        %1583 = vmatprep.mubr.f32.mxu0 0.0
        %1584 = vmatmul.mubr.f32.gmra.mrb[0].mxu0 %v1212
        %v1585 = vpop.f32.mrb[0].mxu0
        %v1586 = vadd.f32 0.0, %v1585
        %v1587 = vpop.f32.mrb[0].mxu0
        %1588 = vmatprep.mubr.f32.mxu0 0.0
        %1589 = vmatmul.mubr.f32.gmra.mrb[0].mxu0 %v1214
        %v1590 = vpop.f32.mrb[0].mxu0
        %v1591 = vadd.f32 0.0, %v1590
        %v1592 = vpop.f32.mrb[0].mxu0
        %1593 = vmatprep.mubr.f32.mxu0 0.0
        %1594 = vmatmul.mubr.f32.gmra.mrb[0].mxu0 %v1217
        %v1595 = vpop.f32.mrb[0].mxu0
        %v1596 = vadd.f32 0.0, %v1595
        %v1597 = vpop.f32.mrb[0].mxu0
        %1598 = vmatprep.mubr.f32.mxu0 0.0
        %1599 = vmatmul.mubr.f32.gmra.mrb[0].mxu0 %v1219
        %v1600 = vpop.f32.mrb[0].mxu0
        %v1601 = vadd.f32 0.0, %v1600
        %v1602 = vpop.f32.mrb[0].mxu0
        %1603 = vmatprep.mubr.f32.mxu0 0.0
        %1604 = vmatmul.mubr.f32.gmra.mrb[0].mxu0 %v1222
        %v1605 = vpop.f32.mrb[0].mxu0
        %v1606 = vadd.f32 0.0, %v1605
        %v1607 = vpop.f32.mrb[0].mxu0
        %1608 = vmatprep.mubr.f32.mxu0 0.0
        %1609 = vmatmul.mubr.f32.gmra.mrb[0].mxu0 %v1224
        %v1610 = vpop.f32.mrb[0].mxu0
        %v1611 = vadd.f32 0.0, %v1610
        %v1612 = vpop.f32.mrb[0].mxu0
        %1613 = vmatprep.mubr.f32.mxu0 0.0
        %1614 = vmatmul.mubr.f32.gmra.mrb[0].mxu0 %v1227
        %v1615 = vpop.f32.mrb[0].mxu0
        %v1616 = vadd.f32 0.0, %v1615
        %v1617 = vpop.f32.mrb[0].mxu0
        %1618 = vmatprep.mubr.f32.mxu0 0.0
        %1619 = vmatmul.mubr.f32.gmra.mrb[0].mxu0 %v1229
        %v1620 = vpop.f32.mrb[0].mxu0
        %v1621 = vadd.f32 0.0, %v1620
        %v1622 = vpop.f32.mrb[0].mxu0
        %1623 = vdwg.mxu0
        %v1624 = vadd.f32 %v1494, %v1586
        %v1625 = vadd.f32 %v1495, %v1591
        %v1626 = vadd.f32 %v1496, %v1596
        %v1627 = vadd.f32 %v1497, %v1601
        %v1628 = vadd.f32 %v1498, %v1606
        %v1629 = vadd.f32 %v1499, %v1611
        %v1630 = vadd.f32 %v1500, %v1616
        %v1631 = vadd.f32 %v1501, %v1621
        %v1632 = vld [vmem:[%s312] sm:$0x1]
        %v1634 = vlaneseq
        %v1635 = vshrl.u32 %v1634, 7
        %v1636 = vsub.s32 0, %v1635
        %v1637 = vrot.slane %v1632, %v1636
        %v1639 = vmul.f32 %v1624, %v1637
        %v1640 = vmul.f32 %v1625, %v1637
        %v1641 = vmul.f32 %v1626, %v1637
        %v1642 = vmul.f32 %v1627, %v1637
        %v1643 = vmul.f32 %v1628, %v1637
        %v1644 = vmul.f32 %v1629, %v1637
        %v1645 = vmul.f32 %v1630, %v1637
        %v1646 = vmul.f32 %v1631, %v1637
        %v1647 = vld [vmem:[%s326] sm:$0xff]
        %v1648 = vld [vmem:[%s326 + $0x8] sm:$0xff]
        %v1649 = vld [vmem:[%s326 + $0x10] sm:$0xff]
        %v1650 = vld [vmem:[%s326 + $0x18] sm:$0xff]
        %v1651 = vld [vmem:[%s326 + $0x20] sm:$0xff]
        %v1652 = vld [vmem:[%s326 + $0x28] sm:$0xff]
        %v1653 = vld [vmem:[%s326 + $0x30] sm:$0xff]
        %v1654 = vld [vmem:[%s326 + $0x38] sm:$0xff]
        %1656 = vset.pattern.permute.xlu0 0
        %1657 = vperm.xlu0 %1656, %v1647
        %v1658 = vpop.permute.xlu0 %1657
        %1661 = vset.pattern.permute.xlu0 0
        %1662 = vperm.xlu0 %1661, %v1648
        %v1663 = vpop.permute.xlu0 %1662
        %1666 = vset.pattern.permute.xlu0 0
        %1667 = vperm.xlu0 %1666, %v1649
        %v1668 = vpop.permute.xlu0 %1667
        %1671 = vset.pattern.permute.xlu0 0
        %1672 = vperm.xlu0 %1671, %v1650
        %v1673 = vpop.permute.xlu0 %1672
        %1676 = vset.pattern.permute.xlu0 0
        %1677 = vperm.xlu0 %1676, %v1651
        %v1678 = vpop.permute.xlu0 %1677
        %1681 = vset.pattern.permute.xlu0 0
        %1682 = vperm.xlu0 %1681, %v1652
        %v1683 = vpop.permute.xlu0 %1682
        %1686 = vset.pattern.permute.xlu0 0
        %1687 = vperm.xlu0 %1686, %v1653
        %v1688 = vpop.permute.xlu0 %1687
        %1691 = vset.pattern.permute.xlu0 0
        %1692 = vperm.xlu0 %1691, %v1654
        %v1693 = vpop.permute.xlu0 %1692
        %v1695 = vadd.f32 %v1639, %v1658
        %v1696 = vadd.f32 %v1640, %v1663
        %v1697 = vadd.f32 %v1641, %v1668
        %v1698 = vadd.f32 %v1642, %v1673
        %v1699 = vadd.f32 %v1643, %v1678
        %v1700 = vadd.f32 %v1644, %v1683
        %v1701 = vadd.f32 %v1645, %v1688
        %v1702 = vadd.f32 %v1646, %v1693
        %v1703 = vld [vmem:[%s5] sm:$0x1]
        %v1705 = vlaneseq
        %v1706 = vshrl.u32 %v1705, 7
        %v1707 = vsub.s32 0, %v1706
        %v1708 = vrot.slane %v1703, %v1707
        %v1710 = vadd.f32 %v1695, %v1708
        %v1711 = vadd.f32 %v1696, %v1708
        %v1712 = vadd.f32 %v1697, %v1708
        %v1713 = vadd.f32 %v1698, %v1708
        %v1714 = vadd.f32 %v1699, %v1708
        %v1715 = vadd.f32 %v1700, %v1708
        %v1716 = vadd.f32 %v1701, %v1708
        %v1717 = vadd.f32 %v1702, %v1708
        %vm1718 = vcmp.ge.f32.partialorder %v1710, 0.0
        %vm1719 = vcmp.ge.f32.partialorder %v1711, 0.0
        %vm1720 = vcmp.ge.f32.partialorder %v1712, 0.0
        %vm1721 = vcmp.ge.f32.partialorder %v1713, 0.0
        %vm1722 = vcmp.ge.f32.partialorder %v1714, 0.0
        %vm1723 = vcmp.ge.f32.partialorder %v1715, 0.0
        %vm1724 = vcmp.ge.f32.partialorder %v1716, 0.0
        %vm1725 = vcmp.ge.f32.partialorder %v1717, 0.0
        %v1726 = vmul.f32 %v1710, 0.2
        %v1727 = vmul.f32 %v1711, 0.2
        %v1728 = vmul.f32 %v1712, 0.2
        %v1729 = vmul.f32 %v1713, 0.2
        %v1730 = vmul.f32 %v1714, 0.2
        %v1731 = vmul.f32 %v1715, 0.2
        %v1732 = vmul.f32 %v1716, 0.2
        %v1733 = vmul.f32 %v1717, 0.2
        %v1734 = vsel %vm1718, %v1710, %v1726
        %v1735 = vsel %vm1719, %v1711, %v1727
        %v1736 = vsel %vm1720, %v1712, %v1728
        %v1737 = vsel %vm1721, %v1713, %v1729
        %v1738 = vsel %vm1722, %v1714, %v1730
        %v1739 = vsel %vm1723, %v1715, %v1731
        %v1740 = vsel %vm1724, %v1716, %v1732
        %v1741 = vsel %vm1725, %v1717, %v1733
        %v1742 = vmul.f32 %v1734, 1.4142135
        %v1743 = vmul.f32 %v1735, 1.4142135
        %v1744 = vmul.f32 %v1736, 1.4142135
        %v1745 = vmul.f32 %v1737, 1.4142135
        %v1746 = vmul.f32 %v1738, 1.4142135
        %v1747 = vmul.f32 %v1739, 1.4142135
        %v1748 = vmul.f32 %v1740, 1.4142135
        %v1749 = vmul.f32 %v1741, 1.4142135
        %v1750 = vlaneseq
        %v1751 = vand.u32 %v1750, 127
        %vm1752 = vcmp.lt.s32.totalorder %v1751, 8
        %v1753 = vsel %vm1752, 1, 0
        %vm1754 = vcmp.eq.s32.totalorder %v1753, 1
        %v1755 = vsel %vm1754, %v1742, 0.0
        %v1756 = vsel %vm1754, %v1743, 0.0
        %v1757 = vsel %vm1754, %v1744, 0.0
        %v1758 = vsel %vm1754, %v1745, 0.0
        %v1759 = vsel %vm1754, %v1746, 0.0
        %v1760 = vsel %vm1754, %v1747, 0.0
        %v1761 = vsel %vm1754, %v1748, 0.0
        %v1762 = vsel %vm1754, %v1749, 0.0
        %1763 = vst [vmem:[%s306] sm:$0xff] %v1755
        %1764 = vst [vmem:[%s306 + $0x8] sm:$0xff] %v1756
        %1765 = vst [vmem:[%s306 + $0x10] sm:$0xff] %v1757
        %1766 = vst [vmem:[%s306 + $0x18] sm:$0xff] %v1758
        %1767 = vst [vmem:[%s306 + $0x20] sm:$0xff] %v1759
        %1768 = vst [vmem:[%s306 + $0x28] sm:$0xff] %v1760
        %1769 = vst [vmem:[%s306 + $0x30] sm:$0xff] %v1761
        %1770 = vst [vmem:[%s306 + $0x38] sm:$0xff] %v1762
        %s1771 = sand.u32 %s190, 1
        %s1772 = scalar_lea.sflag [#allocation3], %s1771
        %s1773 = sand.u32 %s190, 1
        %s1774 = smul.addr %s1773, 64
        %s1775 = scalar_lea.vmem [#allocation2], %s1774
        // Predicated region
        $region45: #{tpu_custom_call.1} parent=43 // pred_check
          %p1776 = pneg %p200
        $region46: #{tpu_custom_call.1} parent=43 // pred_check_branch
          %1778 = sbr.rel (%p1776) target = $region48
        $region47: #{tpu_custom_call.1} parent=43 // pred_region
          %s1779 = smul.u32 8, %s25
          %s1781 = ssub.s32 1024, 1024
          %1782 = vsyncadd %s1772, %s1781
          %s1783 = smul.addr %s24, 32
          %s1784 = sadd.s32 %s1779, %s1783
          %s1785 = smul.addr %s1784, 128
          %s1786 = scalar_lea.hbm %s6, %s1785
          %s1787 = sshll.u32 %s1775, 4
          %s1788 = int_to_ptr.vmem [resolvable:$true] %s1787
          %1793 = dma.vmem_to_hbm [thread:$0]  %s1788, 1024, %s1786, %s1772, 128, 128, 8
        $region48: #{tpu_custom_call.1} parent=43 // pred_fallthru
          _
      $region44: #{tpu_custom_call.1} parent=5 // pred_fallthru
        _
      %p1794 = scmp.le.s32.totalorder 2, %s15
      // Predicated region
      $region49: #{tpu_custom_call.1} parent=5 // pred_check
        %p1795 = pneg %p1794
      $region50: #{tpu_custom_call.1} parent=5 // pred_check_branch
        %1797 = sbr.rel (%p1795) target = $region52
      $region51: #{tpu_custom_call.1} parent=5 // pred_region
        %s1798 = ssub.s32 %s15, 2
        // Predicated region
        $region53: #{tpu_custom_call.1} parent=51 // pred_check
          %p1799 = pneg %p206
        $region54: #{tpu_custom_call.1} parent=51 // pred_check_branch
          %1801 = sbr.rel (%p1799) target = $region56
        $region55: #{tpu_custom_call.1} parent=51 // pred_region
          %s1802 = sand.u32 %s191, 1
          %s1803 = scalar_lea.sflag [#allocation3], %s1802
          %s1804 = sand.u32 %s191, 1
          %s1805 = smul.addr %s1804, 64
          %s1806 = scalar_lea.vmem [#allocation2], %s1805
          %1807 = dma.done %s1803, 1024
        $region56: #{tpu_custom_call.1} parent=51 // pred_fallthru
          _
      $region52: #{tpu_custom_call.1} parent=5 // pred_fallthru
        _
    $region6: #{tpu_custom_call.1} parent=1 // loop_footer
      %s19 = sadd.s32 1, %s15
    $region7: #{tpu_custom_call.1} parent=1 // loop_footer_branch
      %14 = sbr.rel target = $region3
    $region8: #{tpu_custom_call.1} parent=1 // loop_exit
      _
    %1808 = vsyncpa [#allocation3], 1
    %s1809 = scalar_lea.sflag [#allocation3], 1
    %1810 = vsyncpa %s1809, 1

</llo_original>
